<compile_context>
chip_gen: v7x
topology: tpu7x:2x2x1
jax: 0.10.0
libtpu: 0.0.40
codegen_flags: <defaults>
</compile_context>

<pallas_src>
import jax
import jax.numpy as jnp
from jax.experimental import pallas as pl
from jax.experimental.pallas import tpu as pltpu


def _apply_activation(y, activation):
    if activation == 'Relu':
        return jnp.maximum(y, 0.0)
    if activation == 'Tanh':
        return jnp.tanh(y)
    if activation == 'Hardtanh':
        # torch.nn.Hardtanh(min_val=0, max_val=1)
        return jnp.clip(y, 0.0, 1.0)
    return y


def _make_fused_kernel(layer_dims, batch, ts, activation, construct_dtype):
    """Fused kernel: all layers, TS Monte-Carlo samples per grid step."""
    n_layers = len(layer_dims)
    B = batch
    cd = construct_dtype  # dtype for the sigma*eps weight construction (bf16 on v6e/v7x, f32 on v5e)

    def kernel(*refs):
        # refs layout:
        #   0: x_ref    (B, Din0)        bf16, resident
        #   1: mu1_ref  (B, H1)          f32,  resident (hoisted x @ W1_mu.T)
        #   layer 0   : ws0_tiled (Din0, TS*H1) bf16 resident,
        #               ew0 (1, Din0, TS*H1) bf16 per-step,
        #               b0  (1, TS, H1)     f32 per-step
        #   layer i>0 : wmT (Din, Dout) bf16 resident, wsT (Din, Dout) bf16 resident,
        #               ew  (TS, Din, Dout) bf16 per-step, b (1, TS, Dout) f32 per-step
        #   -1: o_ref   (TS*B, Cout)
        o_ref = refs[-1]
        x_ref, mu1_ref = refs[0], refs[1]
        idx = 2

        # ---- layer 0: hoisted mean path + N-packed sigma matmul over the TS samples ----
        ws0_ref = refs[idx]; idx += 1
        ew0_ref = refs[idx]; idx += 1
        b0_ref = refs[idx]; idx += 1
        h1 = layer_dims[0][1]

        delta0 = (ws0_ref[...].astype(cd) * ew0_ref[0].astype(cd)).astype(jnp.bfloat16)
        y0p = jnp.dot(x_ref[...], delta0, preferred_element_type=jnp.float32)   # (B, TS*H1) f32
        mu1 = mu1_ref[...]                                                       # (B, H1) f32
        b0 = b0_ref[0]                                                           # (TS, H1) f32
        y_flat = jnp.concatenate(
            [y0p[:, t * h1:(t + 1) * h1] + mu1 + b0[t:t + 1, :] for t in range(ts)],
            axis=0)                                                              # (TS*B, H1) f32

        # ---- layers 1..n-1: y = h @ Wmu (one packed matmul) + h_s @ (Wsig*eps_s) + b_s ----
        for i in range(1, n_layers):
            wm_ref = refs[idx]; idx += 1
            ws_ref = refs[idx]; idx += 1
            ew_ref = refs[idx]; idx += 1
            b_ref = refs[idx]; idx += 1

            h_bf = _apply_activation(y_flat, activation).astype(jnp.bfloat16)    # (TS*B, Din)
            # mean part: one (TS*B, Din) @ (Din, Dout) matmul across the whole sample batch
            y_mean = jnp.dot(h_bf, wm_ref[...], preferred_element_type=jnp.float32)
            ws_c = ws_ref[...].astype(cd)                                        # hoisted upcast
            b = b_ref[0]                                                         # (TS, Dout)
            sig_rows = []
            for t in range(ts):
                delta_t = (ws_c * ew_ref[t].astype(cd)).astype(jnp.bfloat16)     # (Din, Dout)
                h_t = h_bf[t * B:(t + 1) * B, :]                                 # (B, Din)
                sig_rows.append(
                    jnp.dot(h_t, delta_t, preferred_element_type=jnp.float32)
                    + b[t:t + 1, :])
            y_flat = y_mean + jnp.concatenate(sig_rows, axis=0)                  # (TS*B, Dout)

        # ---- numerically stable log_softmax over the class dim (row-wise => flat is fine) ----
        m = jnp.max(y_flat, axis=-1, keepdims=True)
        z = y_flat - m
        lse = jnp.log(jnp.sum(jnp.exp(z), axis=-1, keepdims=True))
        o_ref[...] = (z - lse).astype(o_ref.dtype)

    return kernel


def fcnn_bbb_forward(x, params, eps, *, activation='Relu', construct_dtype=jnp.bfloat16):
    """
    x      : (B, Din) float32
    params : list of (weight_mu (Dout,Din), weight_sigma (Dout,Din), bias_mu (Dout,), bias_sigma (Dout,))
    eps    : list of (eps_w, eps_b) in the kernel layout produced by sample_eps:
               layer 0   : eps_w (S//TS, Din0, TS*H1)  (bf16, TS samples packed along N)
               layer i>0 : eps_w (S, Din_i, Dout_i)    (bf16, already (Din,Dout)-transposed)
               all layers: eps_b (S, Dout_i)           (f32)
    returns: (S, B, num_classes) float32 log-probabilities (log_softmax over dim=2)
    """
    if activation not in {'Tanh', 'Relu', 'Hardtanh'}:
        raise ValueError(f"Invalid activation name {activation!r}")

    n_layers = len(params)
    B, din0 = x.shape
    h1 = params[0][0].shape[0]
    cout = params[-1][0].shape[0]
    layer_dims = [(p[0].shape[1], p[0].shape[0]) for p in params]  # (Din, Dout) per layer

    S = eps[0][1].shape[0]          # total Monte-Carlo samples (from eps_b)
    G = eps[0][0].shape[0]          # grid extent = number of sample blocks
    assert S % G == 0, (S, G)
    ts = S // G                     # samples per grid step
    assert eps[0][0].shape == (G, din0, ts * h1), eps[0][0].shape

    x_f32 = x.astype(jnp.float32)
    x_bf = x_f32.astype(jnp.bfloat16)

    # Hoisted mean-path matmul of layer 0 (identical for every sample), default f32 precision.
    mu1 = jnp.dot(x_f32, params[0][0].T.astype(jnp.float32))        # (B, H1) f32

    inputs = [x_bf, mu1]
    in_specs = [
        pl.BlockSpec((B, din0), lambda g: (0, 0)),                  # x, resident, bf16
        pl.BlockSpec((B, h1), lambda g: (0, 0)),                    # hoisted mean path, resident
    ]

    for i, (wm, ws, bm, bs) in enumerate(params):
        ew, eb = eps[i]
        din, dout = layer_dims[i]
        # pre-sampled biases, reshaped so each grid step gets its own (TS, Dout) block
        b_all = (bm[None, :] + bs[None, :] * eb.astype(jnp.float32)).reshape(G, ts, dout)

        if i == 0:
            ws0_tiled = jnp.tile(ws.T.astype(jnp.bfloat16), (1, ts))     # (Din0, TS*H1) bf16
            inputs += [ws0_tiled, ew, b_all]
            in_specs += [
                pl.BlockSpec((din, ts * dout), lambda g: (0, 0)),         # sigma.T tiled, resident
                pl.BlockSpec((1, din, ts * dout), lambda g: (g, 0, 0)),   # packed eps, per-step
                pl.BlockSpec((1, ts, dout), lambda g: (g, 0, 0)),         # sampled biases, per-step
            ]
        else:
            assert ew.shape == (S, din, dout), ew.shape
            inputs += [wm.T.astype(jnp.bfloat16), ws.T.astype(jnp.bfloat16), ew, b_all]
            in_specs += [
                pl.BlockSpec((din, dout), lambda g: (0, 0)),              # mu.T,    resident bf16
                pl.BlockSpec((din, dout), lambda g: (0, 0)),              # sigma.T, resident bf16
                pl.BlockSpec((ts, din, dout), lambda g: (g, 0, 0)),       # eps, per-step
                pl.BlockSpec((1, ts, dout), lambda g: (g, 0, 0)),         # sampled biases, per-step
            ]

    kernel = _make_fused_kernel(layer_dims, B, ts, activation, construct_dtype)

    out_flat = pl.pallas_call(
        kernel,
        out_shape=jax.ShapeDtypeStruct((S * B, cout), jnp.float32),
        grid=(G,),
        in_specs=in_specs,
        out_specs=pl.BlockSpec((ts * B, cout), lambda g: (g, 0)),
        compiler_params=pltpu.CompilerParams(
            dimension_semantics=("parallel",),          # sample blocks are independent -> megacore
            vmem_limit_bytes=64 * 1024 * 1024),
    )(*inputs)

    # free reshape (row-major): row s*B + b  ->  [s, b]
    return out_flat.reshape(S, B, cout)


# ----------------------------- reference & test helpers -----------------------------

def _eps_w_per_sample(eps):
    """Convert kernel-layout eps_w tensors to per-sample (S, Din, Dout) f32 arrays."""
    out = []
    for i, (ew, eb) in enumerate(eps):
        S = eb.shape[0]
        if i == 0:
            G, din, tsdout = ew.shape
            ts = S // G
            dout = tsdout // ts
            e = ew.astype(jnp.float32).reshape(G, din, ts, dout)
            e = jnp.transpose(e, (0, 2, 1, 3)).reshape(S, din, dout)
        else:
            e = ew.astype(jnp.float32)
        out.append(e)
    return out


def fcnn_bbb_reference(x, params, eps, *, activation='Relu'):
    """Pure-JAX f32 reference (same sampled noise) for correctness checking."""
    eps_w = _eps_w_per_sample(eps)
    S = eps[0][1].shape[0]
    h = jnp.broadcast_to(x[None].astype(jnp.float32), (S,) + x.shape)
    n_layers = len(params)
    for i, (wm, ws, bm, bs) in enumerate(params):
        ew = eps_w[i]                                    # (S, Din, Dout)
        eb = eps[i][1].astype(jnp.float32)               # (S, Dout)
        w = wm.T[None] + ws.T[None] * ew                 # (S, Din, Dout)
        b = bm[None] + bs[None] * eb
        h = jnp.einsum('sbi,sio->sbo', h, w,
                       precision=jax.lax.Precision.HIGHEST) + b[:, None, :]
        if i < n_layers - 1:
            h = _apply_activation(h, activation)
        else:
            h = jax.nn.log_softmax(h, axis=2)
    return h


def init_params(key, archi, sigma_init=0.05, mu_prior=0.0):
    """Deterministic synthetic parameters (mu ~ N(mu_prior, 0.1), sigma = sigma_init)."""
    params = []
    for i in range(len(archi) - 1):
        din, dout = archi[i], archi[i + 1]
        key, k1, k2 = jax.random.split(key, 3)
        wm = mu_prior + 0.1 * jax.random.normal(k1, (dout, din), jnp.float32)
        ws = jnp.full((dout, din), sigma_init, jnp.float32)
        bm = mu_prior + 0.1 * jax.random.normal(k2, (dout,), jnp.float32)
        bs = jnp.full((dout,), sigma_init, jnp.float32)
        params.append((wm, ws, bm, bs))
    return params, key


def sample_eps(key, archi, samples, ts):
    """
    Gaussian noise, generated directly in the kernel layout (no wrapper-side transposes):
      layer 0   : eps_w (samples//ts, Din0, ts*H1) bf16 -- TS samples packed along N so the kernel
                  issues ONE (B, Din0) @ (Din0, TS*H1) sigma matmul per grid step.
      layer i>0 : eps_w (samples, Din_i, Dout_i) bf16 -- (Din, Dout)-transposed, TS samples/step.
      all layers: eps_b (samples, Dout_i) f32 (tiny).
    eps_w stays bf16 (halves its HBM stream, the dominant traffic).
    """
    # TODO(synk): optionally generate eps_w on-chip (pltpu.prng_seed / prng_random_bits + a cheap
    # normal transform) to eliminate the eps HBM stream entirely (largest win on v5e/v6e).
    assert samples % ts == 0
    G = samples // ts
    eps = []
    for i in range(len(archi) - 1):
        din, dout = archi[i], archi[i + 1]
        key, k1, k2 = jax.random.split(key, 3)
        if i == 0:
            ew = jax.random.normal(k1, (G, din, ts * dout), jnp.float32).astype(jnp.bfloat16)
        else:
            ew = jax.random.normal(k1, (samples, din, dout), jnp.float32).astype(jnp.bfloat16)
        eb = jax.random.normal(k2, (samples, dout), jnp.float32)
        eps.append((ew, eb))
    return eps, key


if __name__ == "__main__":
    key = jax.random.PRNGKey(0)

    # Small shapes consistent with the module: archi_fcnn = [num_in, hidden, num_out]
    archi = [32, 64, 10]
    batch = 8
    samples = 8
    ts = 4                      # samples per grid step -> grid extent 2 (even -> balanced megacore)
    activation = 'Relu'

    params, key = init_params(key, archi, sigma_init=0.05, mu_prior=0.0)
    eps, key = sample_eps(key, archi, samples, ts)
    key, kx = jax.random.split(key)
    x = jax.random.normal(kx, (batch, archi[0]), jnp.float32)

    fwd = jax.jit(lambda xx, pp, ee: fcnn_bbb_forward(xx, pp, ee, activation=activation))
    out = jax.block_until_ready(fwd(x, params, eps))

    assert out.shape == (samples, batch, archi[-1])
    # log_softmax sanity: logsumexp over the class dim must be ~0
    assert jnp.allclose(jax.nn.logsumexp(out, axis=2), 0.0, atol=1e-4)

    # correctness vs. pure-JAX f32 reference (tolerance accounts for bf16 matmul operands / eps)
    ref = fcnn_bbb_reference(x, params, eps, activation=activation)
    max_err = float(jnp.max(jnp.abs(out - ref)))
    assert max_err < 1e-1, max_err

    print("KERNEL_OK")
</pallas_src>

<mosaic_0001>
module attributes {stable_mosaic.version = 11 : i64} {
  func.func @kernel(%arg0: i32, %arg1: memref<8x32xbf16, #tpu.memory_space<vmem>>, %arg2: memref<8x64xf32, #tpu.memory_space<vmem>>, %arg3: memref<32x256xbf16, #tpu.memory_space<vmem>>, %arg4: memref<1x32x256xbf16, #tpu.memory_space<vmem>>, %arg5: memref<1x4x64xf32, #tpu.memory_space<vmem>>, %arg6: memref<64x10xbf16, #tpu.memory_space<vmem>>, %arg7: memref<64x10xbf16, #tpu.memory_space<vmem>>, %arg8: memref<4x64x10xbf16, #tpu.memory_space<vmem>>, %arg9: memref<1x4x10xf32, #tpu.memory_space<vmem>>, %arg10: memref<32x10xf32, #tpu.memory_space<vmem>>) attributes {dimension_semantics = [#tpu.dimension_semantics<parallel>], iteration_bounds = array<i64: 2>, scalar_prefetch = 0 : i64, scratch_operands = 0 : i64, tpu.core_type = #tpu.core_type<tc>, window_params = [{pipeline_mode = #tpu.pipeline_mode<synchronous>, transform_indices = @transform_0, window_bounds = array<i64: 8, 32>}, {pipeline_mode = #tpu.pipeline_mode<synchronous>, transform_indices = @transform_1, window_bounds = array<i64: 8, 64>}, {pipeline_mode = #tpu.pipeline_mode<synchronous>, transform_indices = @transform_2, window_bounds = array<i64: 32, 256>}, {transform_indices = @transform_3, window_bounds = array<i64: 1, 32, 256>}, {transform_indices = @transform_4, window_bounds = array<i64: 1, 4, 64>}, {pipeline_mode = #tpu.pipeline_mode<synchronous>, transform_indices = @transform_5, window_bounds = array<i64: 64, 10>}, {pipeline_mode = #tpu.pipeline_mode<synchronous>, transform_indices = @transform_6, window_bounds = array<i64: 64, 10>}, {transform_indices = @transform_7, window_bounds = array<i64: 4, 64, 10>}, {transform_indices = @transform_8, window_bounds = array<i64: 1, 4, 10>}, {transform_indices = @transform_9, window_bounds = array<i64: 32, 10>}]} {
    %c0 = arith.constant 0 : index
    %c0_0 = arith.constant 0 : index
    %0 = vector.load %arg3[%c0, %c0_0] : memref<32x256xbf16, #tpu.memory_space<vmem>>, vector<32x256xbf16>
    %c0_1 = arith.constant 0 : index
    %c0_2 = arith.constant 0 : index
    %c0_3 = arith.constant 0 : index
    %1 = vector.load %arg4[%c0_1, %c0_2, %c0_3] : memref<1x32x256xbf16, #tpu.memory_space<vmem>>, vector<1x32x256xbf16>
    %2 = vector.shape_cast %1 : vector<1x32x256xbf16> to vector<32x256xbf16>
    %3 = arith.mulf %0, %2 : vector<32x256xbf16>
    %c0_4 = arith.constant 0 : index
    %c0_5 = arith.constant 0 : index
    %4 = vector.load %arg1[%c0_4, %c0_5] : memref<8x32xbf16, #tpu.memory_space<vmem>>, vector<8x32xbf16>
    %cst = arith.constant dense<0.000000e+00> : vector<8x256xf32>
    %5 = tpu.matmul %4, %3, %cst {dimension_numbers = #tpu.dot_dimension_numbers<[1], [0], [0], [1], [0, 0, 1, 1], [], []>} : vector<8x32xbf16>, vector<32x256xbf16>, vector<8x256xf32> -> vector<8x256xf32>
    %c0_6 = arith.constant 0 : index
    %c0_7 = arith.constant 0 : index
    %6 = vector.load %arg2[%c0_6, %c0_7] : memref<8x64xf32, #tpu.memory_space<vmem>>, vector<8x64xf32>
    %c0_8 = arith.constant 0 : index
    %c0_9 = arith.constant 0 : index
    %c0_10 = arith.constant 0 : index
    %7 = vector.load %arg5[%c0_8, %c0_9, %c0_10] : memref<1x4x64xf32, #tpu.memory_space<vmem>>, vector<1x4x64xf32>
    %8 = vector.shape_cast %7 : vector<1x4x64xf32> to vector<4x64xf32>
    %9 = vector.extract_strided_slice %5 {offsets = [0, 0], sizes = [8, 64], strides = [1, 1]} : vector<8x256xf32> to vector<8x64xf32>
    %10 = arith.addf %9, %6 : vector<8x64xf32>
    %11 = vector.extract_strided_slice %8 {offsets = [0, 0], sizes = [1, 64], strides = [1, 1]} : vector<4x64xf32> to vector<1x64xf32>
    %12 = vector.broadcast %11 : vector<1x64xf32> to vector<8x64xf32>
    %13 = arith.addf %10, %12 : vector<8x64xf32>
    %14 = vector.extract_strided_slice %5 {offsets = [0, 64], sizes = [8, 64], strides = [1, 1]} : vector<8x256xf32> to vector<8x64xf32>
    %15 = arith.addf %14, %6 : vector<8x64xf32>
    %16 = vector.extract_strided_slice %8 {offsets = [1, 0], sizes = [1, 64], strides = [1, 1]} : vector<4x64xf32> to vector<1x64xf32>
    %17 = vector.broadcast %16 : vector<1x64xf32> to vector<8x64xf32>
    %18 = arith.addf %15, %17 : vector<8x64xf32>
    %19 = vector.extract_strided_slice %5 {offsets = [0, 128], sizes = [8, 64], strides = [1, 1]} : vector<8x256xf32> to vector<8x64xf32>
    %20 = arith.addf %19, %6 : vector<8x64xf32>
    %21 = vector.extract_strided_slice %8 {offsets = [2, 0], sizes = [1, 64], strides = [1, 1]} : vector<4x64xf32> to vector<1x64xf32>
    %22 = vector.broadcast %21 : vector<1x64xf32> to vector<8x64xf32>
    %23 = arith.addf %20, %22 : vector<8x64xf32>
    %24 = vector.extract_strided_slice %5 {offsets = [0, 192], sizes = [8, 64], strides = [1, 1]} : vector<8x256xf32> to vector<8x64xf32>
    %25 = arith.addf %24, %6 : vector<8x64xf32>
    %26 = vector.extract_strided_slice %8 {offsets = [3, 0], sizes = [1, 64], strides = [1, 1]} : vector<4x64xf32> to vector<1x64xf32>
    %27 = vector.broadcast %26 : vector<1x64xf32> to vector<8x64xf32>
    %28 = arith.addf %25, %27 : vector<8x64xf32>
    %29 = tpu.concatenate %13, %18, %23, %28 in 0 : vector<8x64xf32>, vector<8x64xf32>, vector<8x64xf32>, vector<8x64xf32> -> vector<32x64xf32>
    %cst_11 = arith.constant 0.000000e+00 : f32
    %30 = vector.broadcast %cst_11 : f32 to vector<32x64xf32>
    %31 = arith.maximumf %29, %30 : vector<32x64xf32>
    %32 = arith.truncf %31 : vector<32x64xf32> to vector<32x64xbf16>
    %c0_12 = arith.constant 0 : index
    %c0_13 = arith.constant 0 : index
    %33 = vector.load %arg6[%c0_12, %c0_13] : memref<64x10xbf16, #tpu.memory_space<vmem>>, vector<64x10xbf16>
    %cst_14 = arith.constant dense<0.000000e+00> : vector<32x10xf32>
    %34 = tpu.matmul %32, %33, %cst_14 {dimension_numbers = #tpu.dot_dimension_numbers<[1], [0], [0], [1], [0, 0, 1, 1], [], []>} : vector<32x64xbf16>, vector<64x10xbf16>, vector<32x10xf32> -> vector<32x10xf32>
    %c0_15 = arith.constant 0 : index
    %c0_16 = arith.constant 0 : index
    %35 = vector.load %arg7[%c0_15, %c0_16] : memref<64x10xbf16, #tpu.memory_space<vmem>>, vector<64x10xbf16>
    %c0_17 = arith.constant 0 : index
    %c0_18 = arith.constant 0 : index
    %c0_19 = arith.constant 0 : index
    %36 = vector.load %arg9[%c0_17, %c0_18, %c0_19] : memref<1x4x10xf32, #tpu.memory_space<vmem>>, vector<1x4x10xf32>
    %37 = vector.shape_cast %36 : vector<1x4x10xf32> to vector<4x10xf32>
    %c0_20 = arith.constant 0 : index
    %c0_21 = arith.constant 0 : index
    %c0_22 = arith.constant 0 : index
    %38 = vector.load %arg8[%c0_20, %c0_21, %c0_22] : memref<4x64x10xbf16, #tpu.memory_space<vmem>>, vector<1x64x10xbf16>
    %39 = vector.shape_cast %38 : vector<1x64x10xbf16> to vector<64x10xbf16>
    %40 = arith.mulf %35, %39 : vector<64x10xbf16>
    %41 = vector.extract_strided_slice %32 {offsets = [0, 0], sizes = [8, 64], strides = [1, 1]} : vector<32x64xbf16> to vector<8x64xbf16>
    %cst_23 = arith.constant dense<0.000000e+00> : vector<8x10xf32>
    %42 = tpu.matmul %41, %40, %cst_23 {dimension_numbers = #tpu.dot_dimension_numbers<[1], [0], [0], [1], [0, 0, 1, 1], [], []>} : vector<8x64xbf16>, vector<64x10xbf16>, vector<8x10xf32> -> vector<8x10xf32>
    %43 = vector.extract_strided_slice %37 {offsets = [0, 0], sizes = [1, 10], strides = [1, 1]} : vector<4x10xf32> to vector<1x10xf32>
    %44 = vector.broadcast %43 : vector<1x10xf32> to vector<8x10xf32>
    %45 = arith.addf %42, %44 : vector<8x10xf32>
    %c1 = arith.constant 1 : index
    %c0_24 = arith.constant 0 : index
    %c0_25 = arith.constant 0 : index
    %46 = vector.load %arg8[%c1, %c0_24, %c0_25] : memref<4x64x10xbf16, #tpu.memory_space<vmem>>, vector<1x64x10xbf16>
    %47 = vector.shape_cast %46 : vector<1x64x10xbf16> to vector<64x10xbf16>
    %48 = arith.mulf %35, %47 : vector<64x10xbf16>
    %49 = vector.extract_strided_slice %32 {offsets = [8, 0], sizes = [8, 64], strides = [1, 1]} : vector<32x64xbf16> to vector<8x64xbf16>
    %cst_26 = arith.constant dense<0.000000e+00> : vector<8x10xf32>
    %50 = tpu.matmul %49, %48, %cst_26 {dimension_numbers = #tpu.dot_dimension_numbers<[1], [0], [0], [1], [0, 0, 1, 1], [], []>} : vector<8x64xbf16>, vector<64x10xbf16>, vector<8x10xf32> -> vector<8x10xf32>
    %51 = vector.extract_strided_slice %37 {offsets = [1, 0], sizes = [1, 10], strides = [1, 1]} : vector<4x10xf32> to vector<1x10xf32>
    %52 = vector.broadcast %51 : vector<1x10xf32> to vector<8x10xf32>
    %53 = arith.addf %50, %52 : vector<8x10xf32>
    %c2 = arith.constant 2 : index
    %c0_27 = arith.constant 0 : index
    %c0_28 = arith.constant 0 : index
    %54 = vector.load %arg8[%c2, %c0_27, %c0_28] : memref<4x64x10xbf16, #tpu.memory_space<vmem>>, vector<1x64x10xbf16>
    %55 = vector.shape_cast %54 : vector<1x64x10xbf16> to vector<64x10xbf16>
    %56 = arith.mulf %35, %55 : vector<64x10xbf16>
    %57 = vector.extract_strided_slice %32 {offsets = [16, 0], sizes = [8, 64], strides = [1, 1]} : vector<32x64xbf16> to vector<8x64xbf16>
    %cst_29 = arith.constant dense<0.000000e+00> : vector<8x10xf32>
    %58 = tpu.matmul %57, %56, %cst_29 {dimension_numbers = #tpu.dot_dimension_numbers<[1], [0], [0], [1], [0, 0, 1, 1], [], []>} : vector<8x64xbf16>, vector<64x10xbf16>, vector<8x10xf32> -> vector<8x10xf32>
    %59 = vector.extract_strided_slice %37 {offsets = [2, 0], sizes = [1, 10], strides = [1, 1]} : vector<4x10xf32> to vector<1x10xf32>
    %60 = vector.broadcast %59 : vector<1x10xf32> to vector<8x10xf32>
    %61 = arith.addf %58, %60 : vector<8x10xf32>
    %c3 = arith.constant 3 : index
    %c0_30 = arith.constant 0 : index
    %c0_31 = arith.constant 0 : index
    %62 = vector.load %arg8[%c3, %c0_30, %c0_31] : memref<4x64x10xbf16, #tpu.memory_space<vmem>>, vector<1x64x10xbf16>
    %63 = vector.shape_cast %62 : vector<1x64x10xbf16> to vector<64x10xbf16>
    %64 = arith.mulf %35, %63 : vector<64x10xbf16>
    %65 = vector.extract_strided_slice %32 {offsets = [24, 0], sizes = [8, 64], strides = [1, 1]} : vector<32x64xbf16> to vector<8x64xbf16>
    %cst_32 = arith.constant dense<0.000000e+00> : vector<8x10xf32>
    %66 = tpu.matmul %65, %64, %cst_32 {dimension_numbers = #tpu.dot_dimension_numbers<[1], [0], [0], [1], [0, 0, 1, 1], [], []>} : vector<8x64xbf16>, vector<64x10xbf16>, vector<8x10xf32> -> vector<8x10xf32>
    %67 = vector.extract_strided_slice %37 {offsets = [3, 0], sizes = [1, 10], strides = [1, 1]} : vector<4x10xf32> to vector<1x10xf32>
    %68 = vector.broadcast %67 : vector<1x10xf32> to vector<8x10xf32>
    %69 = arith.addf %66, %68 : vector<8x10xf32>
    %70 = tpu.concatenate %45, %53, %61, %69 in 0 : vector<8x10xf32>, vector<8x10xf32>, vector<8x10xf32>, vector<8x10xf32> -> vector<32x10xf32>
    %71 = arith.addf %34, %70 : vector<32x10xf32>
    %cst_33 = arith.constant dense<0xFF800000> : vector<32xf32>
    %72 = vector.multi_reduction <maximumf>, %71, %cst_33 [1] : vector<32x10xf32> to vector<32xf32>
    %73 = vector.shape_cast %72 : vector<32xf32> to vector<32x1xf32>
    %74 = vector.broadcast %73 : vector<32x1xf32> to vector<32x10xf32>
    %75 = arith.subf %71, %74 : vector<32x10xf32>
    %76 = math.exp %75 : vector<32x10xf32>
    %cst_34 = arith.constant dense<0.000000e+00> : vector<32xf32>
    %77 = vector.multi_reduction <add>, %76, %cst_34 [1] : vector<32x10xf32> to vector<32xf32>
    %78 = vector.shape_cast %77 : vector<32xf32> to vector<32x1xf32>
    %79 = math.log %78 : vector<32x1xf32>
    %80 = vector.broadcast %79 : vector<32x1xf32> to vector<32x10xf32>
    %81 = arith.subf %75, %80 : vector<32x10xf32>
    %c0_35 = arith.constant 0 : index
    %c0_36 = arith.constant 0 : index
    %82 = vector.load %arg10[%c0_35, %c0_36] : memref<32x10xf32, #tpu.memory_space<vmem>>, vector<32x10xf32>
    tpu.vector_store %arg10[%c0_35, %c0_36], %81 {strides = array<i32>} : memref<32x10xf32, #tpu.memory_space<vmem>>, vector<32x10xf32>,
    return
  }
  func.func @transform_0(%arg0: i32) -> (i32, i32) {
    %c0_i32 = arith.constant 0 : i32
    %c0_i32_0 = arith.constant 0 : i32
    %c0_i32_1 = arith.constant 0 : i32
    return %c0_i32, %c0_i32_0 : i32, i32
  }
  func.func @transform_1(%arg0: i32) -> (i32, i32) {
    %c0_i32 = arith.constant 0 : i32
    %c0_i32_0 = arith.constant 0 : i32
    %c0_i32_1 = arith.constant 0 : i32
    return %c0_i32, %c0_i32_0 : i32, i32
  }
  func.func @transform_2(%arg0: i32) -> (i32, i32) {
    %c0_i32 = arith.constant 0 : i32
    %c0_i32_0 = arith.constant 0 : i32
    %c0_i32_1 = arith.constant 0 : i32
    return %c0_i32, %c0_i32_0 : i32, i32
  }
  func.func @transform_3(%arg0: i32) -> (i32, i32, i32) {
    %c0_i32 = arith.constant 0 : i32
    %c0_i32_0 = arith.constant 0 : i32
    %c0_i32_1 = arith.constant 0 : i32
    return %arg0, %c0_i32, %c0_i32_0 : i32, i32, i32
  }
  func.func @transform_4(%arg0: i32) -> (i32, i32, i32) {
    %c0_i32 = arith.constant 0 : i32
    %c0_i32_0 = arith.constant 0 : i32
    %c0_i32_1 = arith.constant 0 : i32
    return %arg0, %c0_i32, %c0_i32_0 : i32, i32, i32
  }
  func.func @transform_5(%arg0: i32) -> (i32, i32) {
    %c0_i32 = arith.constant 0 : i32
    %c0_i32_0 = arith.constant 0 : i32
    %c0_i32_1 = arith.constant 0 : i32
    return %c0_i32, %c0_i32_0 : i32, i32
  }
  func.func @transform_6(%arg0: i32) -> (i32, i32) {
    %c0_i32 = arith.constant 0 : i32
    %c0_i32_0 = arith.constant 0 : i32
    %c0_i32_1 = arith.constant 0 : i32
    return %c0_i32, %c0_i32_0 : i32, i32
  }
  func.func @transform_7(%arg0: i32) -> (i32, i32, i32) {
    %c0_i32 = arith.constant 0 : i32
    %c0_i32_0 = arith.constant 0 : i32
    %c0_i32_1 = arith.constant 0 : i32
    return %arg0, %c0_i32, %c0_i32_0 : i32, i32, i32
  }
  func.func @transform_8(%arg0: i32) -> (i32, i32, i32) {
    %c0_i32 = arith.constant 0 : i32
    %c0_i32_0 = arith.constant 0 : i32
    %c0_i32_1 = arith.constant 0 : i32
    return %arg0, %c0_i32, %c0_i32_0 : i32, i32, i32
  }
  func.func @transform_9(%arg0: i32) -> (i32, i32) {
    %c0_i32 = arith.constant 0 : i32
    %c0_i32_0 = arith.constant 0 : i32
    return %arg0, %c0_i32 : i32, i32
  }
}

</mosaic_0001>

<llo_original>
// kernel: tile.9
$region0: #{tile.9}
  %s0 = inlined_call_operand.vmem [shape: bf16[32,4,64], index: 0, kind: input, shape index: {}]
  %s1 = inlined_call_operand.hbm [shape: bf16[32,256], index: 1, kind: output, shape index: {}]
  $region1: #{tile.9} parent=0
    #allocation0 [shape = 'u8[16384]{0}', space=vmem, size = 0x4000, scoped, tag = 'operand span for operand 1']
    #allocation1 [shape = 's32[1]{0}', space=sflag, size = 0x4, scoped, tag = 'scoped memory for tile.9']
    #allocation2 [shape = 'u8[32768]{0}', space=vmem, size = 0x8000, scoped, tag = 'scoped mem for output reshape']
    #allocation3 [shape = 'u8[131072]{0}', space=vmem, size = 0x20000, scoped, tag = 'scoped mem for input reshape']
    %2 = vsyncpa [#allocation1], 0
    %s4 = smul.u32 2, 2
    %s5 = sshllo.u32 0, %s4
    %s6 = smul.addr 2, 31
    %s7 = scalar_lea.vmem %s0, %s6
    %s8 = sshrl.u32 %s5, 1
    %s9 = sor.u32 %s5, %s8
    %s10 = sand.u32 %s9, 85
    %s11 = sshrl.u32 %s10, 1
    %s12 = sor.u32 %s10, %s11
    %s13 = sand.u32 51, %s12
    %s14 = sshrl.u32 %s13, 2
    %s15 = sor.u32 %s13, %s14
    %s16 = sand.u32 15, %s15
    %v17 = vld [vmem:[%s7] sm:%s16]
    %v18 = vunpack.c.l.bf16 %v17
    %v19 = vunpack.c.h.bf16 %v17
    %s20 = scalar_lea.vmem [#allocation3], 248
    %21 = vst [vmem:[%s20] sm:%s5] %v18
    %s22 = smul.addr 2, 30
    %s23 = scalar_lea.vmem %s0, %s22
    %s24 = sshrl.u32 %s5, 1
    %s25 = sor.u32 %s5, %s24
    %s26 = sand.u32 %s25, 85
    %s27 = sshrl.u32 %s26, 1
    %s28 = sor.u32 %s26, %s27
    %s29 = sand.u32 51, %s28
    %s30 = sshrl.u32 %s29, 2
    %s31 = sor.u32 %s29, %s30
    %s32 = sand.u32 15, %s31
    %v33 = vld [vmem:[%s23] sm:%s32]
    %v34 = vunpack.c.l.bf16 %v33
    %v35 = vunpack.c.h.bf16 %v33
    %s36 = scalar_lea.vmem [#allocation3], 240
    %37 = vst [vmem:[%s36] sm:%s5] %v34
    %s38 = smul.addr 2, 29
    %s39 = scalar_lea.vmem %s0, %s38
    %s40 = sshrl.u32 %s5, 1
    %s41 = sor.u32 %s5, %s40
    %s42 = sand.u32 %s41, 85
    %s43 = sshrl.u32 %s42, 1
    %s44 = sor.u32 %s42, %s43
    %s45 = sand.u32 51, %s44
    %s46 = sshrl.u32 %s45, 2
    %s47 = sor.u32 %s45, %s46
    %s48 = sand.u32 15, %s47
    %v49 = vld [vmem:[%s39] sm:%s48]
    %v50 = vunpack.c.l.bf16 %v49
    %v51 = vunpack.c.h.bf16 %v49
    %s52 = scalar_lea.vmem [#allocation3], 232
    %53 = vst [vmem:[%s52] sm:%s5] %v50
    %s54 = smul.addr 2, 28
    %s55 = scalar_lea.vmem %s0, %s54
    %s56 = sshrl.u32 %s5, 1
    %s57 = sor.u32 %s5, %s56
    %s58 = sand.u32 %s57, 85
    %s59 = sshrl.u32 %s58, 1
    %s60 = sor.u32 %s58, %s59
    %s61 = sand.u32 51, %s60
    %s62 = sshrl.u32 %s61, 2
    %s63 = sor.u32 %s61, %s62
    %s64 = sand.u32 15, %s63
    %v65 = vld [vmem:[%s55] sm:%s64]
    %v66 = vunpack.c.l.bf16 %v65
    %v67 = vunpack.c.h.bf16 %v65
    %s68 = scalar_lea.vmem [#allocation3], 224
    %69 = vst [vmem:[%s68] sm:%s5] %v66
    %s70 = smul.addr 2, 27
    %s71 = scalar_lea.vmem %s0, %s70
    %s72 = sshrl.u32 %s5, 1
    %s73 = sor.u32 %s5, %s72
    %s74 = sand.u32 %s73, 85
    %s75 = sshrl.u32 %s74, 1
    %s76 = sor.u32 %s74, %s75
    %s77 = sand.u32 51, %s76
    %s78 = sshrl.u32 %s77, 2
    %s79 = sor.u32 %s77, %s78
    %s80 = sand.u32 15, %s79
    %v81 = vld [vmem:[%s71] sm:%s80]
    %v82 = vunpack.c.l.bf16 %v81
    %v83 = vunpack.c.h.bf16 %v81
    %s84 = scalar_lea.vmem [#allocation3], 216
    %85 = vst [vmem:[%s84] sm:%s5] %v82
    %s86 = smul.addr 2, 26
    %s87 = scalar_lea.vmem %s0, %s86
    %s88 = sshrl.u32 %s5, 1
    %s89 = sor.u32 %s5, %s88
    %s90 = sand.u32 %s89, 85
    %s91 = sshrl.u32 %s90, 1
    %s92 = sor.u32 %s90, %s91
    %s93 = sand.u32 51, %s92
    %s94 = sshrl.u32 %s93, 2
    %s95 = sor.u32 %s93, %s94
    %s96 = sand.u32 15, %s95
    %v97 = vld [vmem:[%s87] sm:%s96]
    %v98 = vunpack.c.l.bf16 %v97
    %v99 = vunpack.c.h.bf16 %v97
    %s100 = scalar_lea.vmem [#allocation3], 208
    %101 = vst [vmem:[%s100] sm:%s5] %v98
    %s102 = smul.addr 2, 25
    %s103 = scalar_lea.vmem %s0, %s102
    %s104 = sshrl.u32 %s5, 1
    %s105 = sor.u32 %s5, %s104
    %s106 = sand.u32 %s105, 85
    %s107 = sshrl.u32 %s106, 1
    %s108 = sor.u32 %s106, %s107
    %s109 = sand.u32 51, %s108
    %s110 = sshrl.u32 %s109, 2
    %s111 = sor.u32 %s109, %s110
    %s112 = sand.u32 15, %s111
    %v113 = vld [vmem:[%s103] sm:%s112]
    %v114 = vunpack.c.l.bf16 %v113
    %v115 = vunpack.c.h.bf16 %v113
    %s116 = scalar_lea.vmem [#allocation3], 200
    %117 = vst [vmem:[%s116] sm:%s5] %v114
    %s118 = smul.addr 2, 24
    %s119 = scalar_lea.vmem %s0, %s118
    %s120 = sshrl.u32 %s5, 1
    %s121 = sor.u32 %s5, %s120
    %s122 = sand.u32 %s121, 85
    %s123 = sshrl.u32 %s122, 1
    %s124 = sor.u32 %s122, %s123
    %s125 = sand.u32 51, %s124
    %s126 = sshrl.u32 %s125, 2
    %s127 = sor.u32 %s125, %s126
    %s128 = sand.u32 15, %s127
    %v129 = vld [vmem:[%s119] sm:%s128]
    %v130 = vunpack.c.l.bf16 %v129
    %v131 = vunpack.c.h.bf16 %v129
    %s132 = scalar_lea.vmem [#allocation3], 192
    %133 = vst [vmem:[%s132] sm:%s5] %v130
    %s134 = smul.addr 2, 23
    %s135 = scalar_lea.vmem %s0, %s134
    %s136 = sshrl.u32 %s5, 1
    %s137 = sor.u32 %s5, %s136
    %s138 = sand.u32 %s137, 85
    %s139 = sshrl.u32 %s138, 1
    %s140 = sor.u32 %s138, %s139
    %s141 = sand.u32 51, %s140
    %s142 = sshrl.u32 %s141, 2
    %s143 = sor.u32 %s141, %s142
    %s144 = sand.u32 15, %s143
    %v145 = vld [vmem:[%s135] sm:%s144]
    %v146 = vunpack.c.l.bf16 %v145
    %v147 = vunpack.c.h.bf16 %v145
    %s148 = scalar_lea.vmem [#allocation3], 184
    %149 = vst [vmem:[%s148] sm:%s5] %v146
    %s150 = smul.addr 2, 22
    %s151 = scalar_lea.vmem %s0, %s150
    %s152 = sshrl.u32 %s5, 1
    %s153 = sor.u32 %s5, %s152
    %s154 = sand.u32 %s153, 85
    %s155 = sshrl.u32 %s154, 1
    %s156 = sor.u32 %s154, %s155
    %s157 = sand.u32 51, %s156
    %s158 = sshrl.u32 %s157, 2
    %s159 = sor.u32 %s157, %s158
    %s160 = sand.u32 15, %s159
    %v161 = vld [vmem:[%s151] sm:%s160]
    %v162 = vunpack.c.l.bf16 %v161
    %v163 = vunpack.c.h.bf16 %v161
    %s164 = scalar_lea.vmem [#allocation3], 176
    %165 = vst [vmem:[%s164] sm:%s5] %v162
    %s166 = smul.addr 2, 21
    %s167 = scalar_lea.vmem %s0, %s166
    %s168 = sshrl.u32 %s5, 1
    %s169 = sor.u32 %s5, %s168
    %s170 = sand.u32 %s169, 85
    %s171 = sshrl.u32 %s170, 1
    %s172 = sor.u32 %s170, %s171
    %s173 = sand.u32 51, %s172
    %s174 = sshrl.u32 %s173, 2
    %s175 = sor.u32 %s173, %s174
    %s176 = sand.u32 15, %s175
    %v177 = vld [vmem:[%s167] sm:%s176]
    %v178 = vunpack.c.l.bf16 %v177
    %v179 = vunpack.c.h.bf16 %v177
    %s180 = scalar_lea.vmem [#allocation3], 168
    %181 = vst [vmem:[%s180] sm:%s5] %v178
    %s182 = smul.addr 2, 20
    %s183 = scalar_lea.vmem %s0, %s182
    %s184 = sshrl.u32 %s5, 1
    %s185 = sor.u32 %s5, %s184
    %s186 = sand.u32 %s185, 85
    %s187 = sshrl.u32 %s186, 1
    %s188 = sor.u32 %s186, %s187
    %s189 = sand.u32 51, %s188
    %s190 = sshrl.u32 %s189, 2
    %s191 = sor.u32 %s189, %s190
    %s192 = sand.u32 15, %s191
    %v193 = vld [vmem:[%s183] sm:%s192]
    %v194 = vunpack.c.l.bf16 %v193
    %v195 = vunpack.c.h.bf16 %v193
    %s196 = scalar_lea.vmem [#allocation3], 160
    %197 = vst [vmem:[%s196] sm:%s5] %v194
    %s198 = smul.addr 2, 19
    %s199 = scalar_lea.vmem %s0, %s198
    %s200 = sshrl.u32 %s5, 1
    %s201 = sor.u32 %s5, %s200
    %s202 = sand.u32 %s201, 85
    %s203 = sshrl.u32 %s202, 1
    %s204 = sor.u32 %s202, %s203
    %s205 = sand.u32 51, %s204
    %s206 = sshrl.u32 %s205, 2
    %s207 = sor.u32 %s205, %s206
    %s208 = sand.u32 15, %s207
    %v209 = vld [vmem:[%s199] sm:%s208]
    %v210 = vunpack.c.l.bf16 %v209
    %v211 = vunpack.c.h.bf16 %v209
    %s212 = scalar_lea.vmem [#allocation3], 152
    %213 = vst [vmem:[%s212] sm:%s5] %v210
    %s214 = smul.addr 2, 18
    %s215 = scalar_lea.vmem %s0, %s214
    %s216 = sshrl.u32 %s5, 1
    %s217 = sor.u32 %s5, %s216
    %s218 = sand.u32 %s217, 85
    %s219 = sshrl.u32 %s218, 1
    %s220 = sor.u32 %s218, %s219
    %s221 = sand.u32 51, %s220
    %s222 = sshrl.u32 %s221, 2
    %s223 = sor.u32 %s221, %s222
    %s224 = sand.u32 15, %s223
    %v225 = vld [vmem:[%s215] sm:%s224]
    %v226 = vunpack.c.l.bf16 %v225
    %v227 = vunpack.c.h.bf16 %v225
    %s228 = scalar_lea.vmem [#allocation3], 144
    %229 = vst [vmem:[%s228] sm:%s5] %v226
    %s230 = smul.addr 2, 17
    %s231 = scalar_lea.vmem %s0, %s230
    %s232 = sshrl.u32 %s5, 1
    %s233 = sor.u32 %s5, %s232
    %s234 = sand.u32 %s233, 85
    %s235 = sshrl.u32 %s234, 1
    %s236 = sor.u32 %s234, %s235
    %s237 = sand.u32 51, %s236
    %s238 = sshrl.u32 %s237, 2
    %s239 = sor.u32 %s237, %s238
    %s240 = sand.u32 15, %s239
    %v241 = vld [vmem:[%s231] sm:%s240]
    %v242 = vunpack.c.l.bf16 %v241
    %v243 = vunpack.c.h.bf16 %v241
    %s244 = scalar_lea.vmem [#allocation3], 136
    %245 = vst [vmem:[%s244] sm:%s5] %v242
    %s246 = smul.addr 2, 16
    %s247 = scalar_lea.vmem %s0, %s246
    %s248 = sshrl.u32 %s5, 1
    %s249 = sor.u32 %s5, %s248
    %s250 = sand.u32 %s249, 85
    %s251 = sshrl.u32 %s250, 1
    %s252 = sor.u32 %s250, %s251
    %s253 = sand.u32 51, %s252
    %s254 = sshrl.u32 %s253, 2
    %s255 = sor.u32 %s253, %s254
    %s256 = sand.u32 15, %s255
    %v257 = vld [vmem:[%s247] sm:%s256]
    %v258 = vunpack.c.l.bf16 %v257
    %v259 = vunpack.c.h.bf16 %v257
    %s260 = scalar_lea.vmem [#allocation3], 128
    %261 = vst [vmem:[%s260] sm:%s5] %v258
    %s262 = smul.addr 2, 15
    %s263 = scalar_lea.vmem %s0, %s262
    %s264 = sshrl.u32 %s5, 1
    %s265 = sor.u32 %s5, %s264
    %s266 = sand.u32 %s265, 85
    %s267 = sshrl.u32 %s266, 1
    %s268 = sor.u32 %s266, %s267
    %s269 = sand.u32 51, %s268
    %s270 = sshrl.u32 %s269, 2
    %s271 = sor.u32 %s269, %s270
    %s272 = sand.u32 15, %s271
    %v273 = vld [vmem:[%s263] sm:%s272]
    %v274 = vunpack.c.l.bf16 %v273
    %v275 = vunpack.c.h.bf16 %v273
    %s276 = scalar_lea.vmem [#allocation3], 120
    %277 = vst [vmem:[%s276] sm:%s5] %v274
    %s278 = smul.addr 2, 14
    %s279 = scalar_lea.vmem %s0, %s278
    %s280 = sshrl.u32 %s5, 1
    %s281 = sor.u32 %s5, %s280
    %s282 = sand.u32 %s281, 85
    %s283 = sshrl.u32 %s282, 1
    %s284 = sor.u32 %s282, %s283
    %s285 = sand.u32 51, %s284
    %s286 = sshrl.u32 %s285, 2
    %s287 = sor.u32 %s285, %s286
    %s288 = sand.u32 15, %s287
    %v289 = vld [vmem:[%s279] sm:%s288]
    %v290 = vunpack.c.l.bf16 %v289
    %v291 = vunpack.c.h.bf16 %v289
    %s292 = scalar_lea.vmem [#allocation3], 112
    %293 = vst [vmem:[%s292] sm:%s5] %v290
    %s294 = smul.addr 2, 13
    %s295 = scalar_lea.vmem %s0, %s294
    %s296 = sshrl.u32 %s5, 1
    %s297 = sor.u32 %s5, %s296
    %s298 = sand.u32 %s297, 85
    %s299 = sshrl.u32 %s298, 1
    %s300 = sor.u32 %s298, %s299
    %s301 = sand.u32 51, %s300
    %s302 = sshrl.u32 %s301, 2
    %s303 = sor.u32 %s301, %s302
    %s304 = sand.u32 15, %s303
    %v305 = vld [vmem:[%s295] sm:%s304]
    %v306 = vunpack.c.l.bf16 %v305
    %v307 = vunpack.c.h.bf16 %v305
    %s308 = scalar_lea.vmem [#allocation3], 104
    %309 = vst [vmem:[%s308] sm:%s5] %v306
    %s310 = smul.addr 2, 12
    %s311 = scalar_lea.vmem %s0, %s310
    %s312 = sshrl.u32 %s5, 1
    %s313 = sor.u32 %s5, %s312
    %s314 = sand.u32 %s313, 85
    %s315 = sshrl.u32 %s314, 1
    %s316 = sor.u32 %s314, %s315
    %s317 = sand.u32 51, %s316
    %s318 = sshrl.u32 %s317, 2
    %s319 = sor.u32 %s317, %s318
    %s320 = sand.u32 15, %s319
    %v321 = vld [vmem:[%s311] sm:%s320]
    %v322 = vunpack.c.l.bf16 %v321
    %v323 = vunpack.c.h.bf16 %v321
    %s324 = scalar_lea.vmem [#allocation3], 96
    %325 = vst [vmem:[%s324] sm:%s5] %v322
    %s326 = smul.addr 2, 11
    %s327 = scalar_lea.vmem %s0, %s326
    %s328 = sshrl.u32 %s5, 1
    %s329 = sor.u32 %s5, %s328
    %s330 = sand.u32 %s329, 85
    %s331 = sshrl.u32 %s330, 1
    %s332 = sor.u32 %s330, %s331
    %s333 = sand.u32 51, %s332
    %s334 = sshrl.u32 %s333, 2
    %s335 = sor.u32 %s333, %s334
    %s336 = sand.u32 15, %s335
    %v337 = vld [vmem:[%s327] sm:%s336]
    %v338 = vunpack.c.l.bf16 %v337
    %v339 = vunpack.c.h.bf16 %v337
    %s340 = scalar_lea.vmem [#allocation3], 88
    %341 = vst [vmem:[%s340] sm:%s5] %v338
    %s342 = smul.addr 2, 10
    %s343 = scalar_lea.vmem %s0, %s342
    %s344 = sshrl.u32 %s5, 1
    %s345 = sor.u32 %s5, %s344
    %s346 = sand.u32 %s345, 85
    %s347 = sshrl.u32 %s346, 1
    %s348 = sor.u32 %s346, %s347
    %s349 = sand.u32 51, %s348
    %s350 = sshrl.u32 %s349, 2
    %s351 = sor.u32 %s349, %s350
    %s352 = sand.u32 15, %s351
    %v353 = vld [vmem:[%s343] sm:%s352]
    %v354 = vunpack.c.l.bf16 %v353
    %v355 = vunpack.c.h.bf16 %v353
    %s356 = scalar_lea.vmem [#allocation3], 80
    %357 = vst [vmem:[%s356] sm:%s5] %v354
    %s358 = smul.addr 2, 9
    %s359 = scalar_lea.vmem %s0, %s358
    %s360 = sshrl.u32 %s5, 1
    %s361 = sor.u32 %s5, %s360
    %s362 = sand.u32 %s361, 85
    %s363 = sshrl.u32 %s362, 1
    %s364 = sor.u32 %s362, %s363
    %s365 = sand.u32 51, %s364
    %s366 = sshrl.u32 %s365, 2
    %s367 = sor.u32 %s365, %s366
    %s368 = sand.u32 15, %s367
    %v369 = vld [vmem:[%s359] sm:%s368]
    %v370 = vunpack.c.l.bf16 %v369
    %v371 = vunpack.c.h.bf16 %v369
    %s372 = scalar_lea.vmem [#allocation3], 72
    %373 = vst [vmem:[%s372] sm:%s5] %v370
    %s374 = smul.addr 2, 8
    %s375 = scalar_lea.vmem %s0, %s374
    %s376 = sshrl.u32 %s5, 1
    %s377 = sor.u32 %s5, %s376
    %s378 = sand.u32 %s377, 85
    %s379 = sshrl.u32 %s378, 1
    %s380 = sor.u32 %s378, %s379
    %s381 = sand.u32 51, %s380
    %s382 = sshrl.u32 %s381, 2
    %s383 = sor.u32 %s381, %s382
    %s384 = sand.u32 15, %s383
    %v385 = vld [vmem:[%s375] sm:%s384]
    %v386 = vunpack.c.l.bf16 %v385
    %v387 = vunpack.c.h.bf16 %v385
    %s388 = scalar_lea.vmem [#allocation3], 64
    %389 = vst [vmem:[%s388] sm:%s5] %v386
    %s390 = smul.addr 2, 7
    %s391 = scalar_lea.vmem %s0, %s390
    %s392 = sshrl.u32 %s5, 1
    %s393 = sor.u32 %s5, %s392
    %s394 = sand.u32 %s393, 85
    %s395 = sshrl.u32 %s394, 1
    %s396 = sor.u32 %s394, %s395
    %s397 = sand.u32 51, %s396
    %s398 = sshrl.u32 %s397, 2
    %s399 = sor.u32 %s397, %s398
    %s400 = sand.u32 15, %s399
    %v401 = vld [vmem:[%s391] sm:%s400]
    %v402 = vunpack.c.l.bf16 %v401
    %v403 = vunpack.c.h.bf16 %v401
    %s404 = scalar_lea.vmem [#allocation3], 56
    %405 = vst [vmem:[%s404] sm:%s5] %v402
    %s406 = smul.addr 2, 6
    %s407 = scalar_lea.vmem %s0, %s406
    %s408 = sshrl.u32 %s5, 1
    %s409 = sor.u32 %s5, %s408
    %s410 = sand.u32 %s409, 85
    %s411 = sshrl.u32 %s410, 1
    %s412 = sor.u32 %s410, %s411
    %s413 = sand.u32 51, %s412
    %s414 = sshrl.u32 %s413, 2
    %s415 = sor.u32 %s413, %s414
    %s416 = sand.u32 15, %s415
    %v417 = vld [vmem:[%s407] sm:%s416]
    %v418 = vunpack.c.l.bf16 %v417
    %v419 = vunpack.c.h.bf16 %v417
    %s420 = scalar_lea.vmem [#allocation3], 48
    %421 = vst [vmem:[%s420] sm:%s5] %v418
    %s422 = smul.addr 2, 5
    %s423 = scalar_lea.vmem %s0, %s422
    %s424 = sshrl.u32 %s5, 1
    %s425 = sor.u32 %s5, %s424
    %s426 = sand.u32 %s425, 85
    %s427 = sshrl.u32 %s426, 1
    %s428 = sor.u32 %s426, %s427
    %s429 = sand.u32 51, %s428
    %s430 = sshrl.u32 %s429, 2
    %s431 = sor.u32 %s429, %s430
    %s432 = sand.u32 15, %s431
    %v433 = vld [vmem:[%s423] sm:%s432]
    %v434 = vunpack.c.l.bf16 %v433
    %v435 = vunpack.c.h.bf16 %v433
    %s436 = scalar_lea.vmem [#allocation3], 40
    %437 = vst [vmem:[%s436] sm:%s5] %v434
    %s438 = smul.addr 2, 4
    %s439 = scalar_lea.vmem %s0, %s438
    %s440 = sshrl.u32 %s5, 1
    %s441 = sor.u32 %s5, %s440
    %s442 = sand.u32 %s441, 85
    %s443 = sshrl.u32 %s442, 1
    %s444 = sor.u32 %s442, %s443
    %s445 = sand.u32 51, %s444
    %s446 = sshrl.u32 %s445, 2
    %s447 = sor.u32 %s445, %s446
    %s448 = sand.u32 15, %s447
    %v449 = vld [vmem:[%s439] sm:%s448]
    %v450 = vunpack.c.l.bf16 %v449
    %v451 = vunpack.c.h.bf16 %v449
    %s452 = scalar_lea.vmem [#allocation3], 32
    %453 = vst [vmem:[%s452] sm:%s5] %v450
    %s454 = smul.addr 2, 3
    %s455 = scalar_lea.vmem %s0, %s454
    %s456 = sshrl.u32 %s5, 1
    %s457 = sor.u32 %s5, %s456
    %s458 = sand.u32 %s457, 85
    %s459 = sshrl.u32 %s458, 1
    %s460 = sor.u32 %s458, %s459
    %s461 = sand.u32 51, %s460
    %s462 = sshrl.u32 %s461, 2
    %s463 = sor.u32 %s461, %s462
    %s464 = sand.u32 15, %s463
    %v465 = vld [vmem:[%s455] sm:%s464]
    %v466 = vunpack.c.l.bf16 %v465
    %v467 = vunpack.c.h.bf16 %v465
    %s468 = scalar_lea.vmem [#allocation3], 24
    %469 = vst [vmem:[%s468] sm:%s5] %v466
    %s470 = smul.addr 2, 2
    %s471 = scalar_lea.vmem %s0, %s470
    %s472 = sshrl.u32 %s5, 1
    %s473 = sor.u32 %s5, %s472
    %s474 = sand.u32 %s473, 85
    %s475 = sshrl.u32 %s474, 1
    %s476 = sor.u32 %s474, %s475
    %s477 = sand.u32 51, %s476
    %s478 = sshrl.u32 %s477, 2
    %s479 = sor.u32 %s477, %s478
    %s480 = sand.u32 15, %s479
    %v481 = vld [vmem:[%s471] sm:%s480]
    %v482 = vunpack.c.l.bf16 %v481
    %v483 = vunpack.c.h.bf16 %v481
    %s484 = scalar_lea.vmem [#allocation3], 16
    %485 = vst [vmem:[%s484] sm:%s5] %v482
    %s486 = scalar_lea.vmem %s0, 2
    %s487 = sshrl.u32 %s5, 1
    %s488 = sor.u32 %s5, %s487
    %s489 = sand.u32 %s488, 85
    %s490 = sshrl.u32 %s489, 1
    %s491 = sor.u32 %s489, %s490
    %s492 = sand.u32 51, %s491
    %s493 = sshrl.u32 %s492, 2
    %s494 = sor.u32 %s492, %s493
    %s495 = sand.u32 15, %s494
    %v496 = vld [vmem:[%s486] sm:%s495]
    %v497 = vunpack.c.l.bf16 %v496
    %v498 = vunpack.c.h.bf16 %v496
    %s499 = scalar_lea.vmem [#allocation3], 8
    %500 = vst [vmem:[%s499] sm:%s5] %v497
    %s501 = sshrl.u32 %s5, 1
    %s502 = sor.u32 %s5, %s501
    %s503 = sand.u32 %s502, 85
    %s504 = sshrl.u32 %s503, 1
    %s505 = sor.u32 %s503, %s504
    %s506 = sand.u32 51, %s505
    %s507 = sshrl.u32 %s506, 2
    %s508 = sor.u32 %s506, %s507
    %s509 = sand.u32 15, %s508
    %v510 = vld [vmem:[%s0] sm:%s509]
    %v511 = vunpack.c.l.bf16 %v510
    %v512 = vunpack.c.h.bf16 %v510
    %513 = vst [vmem:[#allocation3] sm:%s5] %v511
    %s514 = smov 3
    %v515 = vld [vmem:[#allocation3] ss:$2 sm:%s514]
    %vm516 = vcmask 523264
    %517 = vst.msk [vmem:[#allocation2] ss:$8 sm:$0x3] %vm516, %v515
    %s518 = scalar_lea.vmem [#allocation3], 8
    %s519 = smov 3
    %v520 = vld [vmem:[%s518] ss:$2 sm:%s519]
    %vm521 = vcmask 523264
    %s522 = scalar_lea.vmem [#allocation2], 1
    %523 = vst.msk [vmem:[%s522] ss:$8 sm:$0x3] %vm521, %v520
    %s524 = scalar_lea.vmem [#allocation3], 16
    %s525 = smov 3
    %v526 = vld [vmem:[%s524] ss:$2 sm:%s525]
    %vm527 = vcmask 523264
    %s528 = scalar_lea.vmem [#allocation2], 2
    %529 = vst.msk [vmem:[%s528] ss:$8 sm:$0x3] %vm527, %v526
    %s530 = scalar_lea.vmem [#allocation3], 24
    %s531 = smov 3
    %v532 = vld [vmem:[%s530] ss:$2 sm:%s531]
    %vm533 = vcmask 523264
    %s534 = scalar_lea.vmem [#allocation2], 3
    %535 = vst.msk [vmem:[%s534] ss:$8 sm:$0x3] %vm533, %v532
    %s536 = scalar_lea.vmem [#allocation3], 32
    %s537 = smov 3
    %v538 = vld [vmem:[%s536] ss:$2 sm:%s537]
    %vm539 = vcmask 523264
    %s540 = scalar_lea.vmem [#allocation2], 4
    %541 = vst.msk [vmem:[%s540] ss:$8 sm:$0x3] %vm539, %v538
    %s542 = scalar_lea.vmem [#allocation3], 40
    %s543 = smov 3
    %v544 = vld [vmem:[%s542] ss:$2 sm:%s543]
    %vm545 = vcmask 523264
    %s546 = scalar_lea.vmem [#allocation2], 5
    %547 = vst.msk [vmem:[%s546] ss:$8 sm:$0x3] %vm545, %v544
    %s548 = scalar_lea.vmem [#allocation3], 48
    %s549 = smov 3
    %v550 = vld [vmem:[%s548] ss:$2 sm:%s549]
    %vm551 = vcmask 523264
    %s552 = scalar_lea.vmem [#allocation2], 6
    %553 = vst.msk [vmem:[%s552] ss:$8 sm:$0x3] %vm551, %v550
    %s554 = scalar_lea.vmem [#allocation3], 56
    %s555 = smov 3
    %v556 = vld [vmem:[%s554] ss:$2 sm:%s555]
    %vm557 = vcmask 523264
    %s558 = scalar_lea.vmem [#allocation2], 7
    %559 = vst.msk [vmem:[%s558] ss:$8 sm:$0x3] %vm557, %v556
    %s560 = scalar_lea.vmem [#allocation3], 64
    %s561 = smov 3
    %v562 = vld [vmem:[%s560] ss:$2 sm:%s561]
    %vm563 = vcmask 523264
    %s564 = scalar_lea.vmem [#allocation2], 16
    %565 = vst.msk [vmem:[%s564] ss:$8 sm:$0x3] %vm563, %v562
    %s566 = scalar_lea.vmem [#allocation3], 72
    %s567 = smov 3
    %v568 = vld [vmem:[%s566] ss:$2 sm:%s567]
    %vm569 = vcmask 523264
    %s570 = scalar_lea.vmem [#allocation2], 17
    %571 = vst.msk [vmem:[%s570] ss:$8 sm:$0x3] %vm569, %v568
    %s572 = scalar_lea.vmem [#allocation3], 80
    %s573 = smov 3
    %v574 = vld [vmem:[%s572] ss:$2 sm:%s573]
    %vm575 = vcmask 523264
    %s576 = scalar_lea.vmem [#allocation2], 18
    %577 = vst.msk [vmem:[%s576] ss:$8 sm:$0x3] %vm575, %v574
    %s578 = scalar_lea.vmem [#allocation3], 88
    %s579 = smov 3
    %v580 = vld [vmem:[%s578] ss:$2 sm:%s579]
    %vm581 = vcmask 523264
    %s582 = scalar_lea.vmem [#allocation2], 19
    %583 = vst.msk [vmem:[%s582] ss:$8 sm:$0x3] %vm581, %v580
    %s584 = scalar_lea.vmem [#allocation3], 96
    %s585 = smov 3
    %v586 = vld [vmem:[%s584] ss:$2 sm:%s585]
    %vm587 = vcmask 523264
    %s588 = scalar_lea.vmem [#allocation2], 20
    %589 = vst.msk [vmem:[%s588] ss:$8 sm:$0x3] %vm587, %v586
    %s590 = scalar_lea.vmem [#allocation3], 104
    %s591 = smov 3
    %v592 = vld [vmem:[%s590] ss:$2 sm:%s591]
    %vm593 = vcmask 523264
    %s594 = scalar_lea.vmem [#allocation2], 21
    %595 = vst.msk [vmem:[%s594] ss:$8 sm:$0x3] %vm593, %v592
    %s596 = scalar_lea.vmem [#allocation3], 112
    %s597 = smov 3
    %v598 = vld [vmem:[%s596] ss:$2 sm:%s597]
    %vm599 = vcmask 523264
    %s600 = scalar_lea.vmem [#allocation2], 22
    %601 = vst.msk [vmem:[%s600] ss:$8 sm:$0x3] %vm599, %v598
    %s602 = scalar_lea.vmem [#allocation3], 120
    %s603 = smov 3
    %v604 = vld [vmem:[%s602] ss:$2 sm:%s603]
    %vm605 = vcmask 523264
    %s606 = scalar_lea.vmem [#allocation2], 23
    %607 = vst.msk [vmem:[%s606] ss:$8 sm:$0x3] %vm605, %v604
    %s608 = scalar_lea.vmem [#allocation3], 128
    %s609 = smov 3
    %v610 = vld [vmem:[%s608] ss:$2 sm:%s609]
    %vm611 = vcmask 523264
    %s612 = scalar_lea.vmem [#allocation2], 32
    %613 = vst.msk [vmem:[%s612] ss:$8 sm:$0x3] %vm611, %v610
    %s614 = scalar_lea.vmem [#allocation3], 136
    %s615 = smov 3
    %v616 = vld [vmem:[%s614] ss:$2 sm:%s615]
    %vm617 = vcmask 523264
    %s618 = scalar_lea.vmem [#allocation2], 33
    %619 = vst.msk [vmem:[%s618] ss:$8 sm:$0x3] %vm617, %v616
    %s620 = scalar_lea.vmem [#allocation3], 144
    %s621 = smov 3
    %v622 = vld [vmem:[%s620] ss:$2 sm:%s621]
    %vm623 = vcmask 523264
    %s624 = scalar_lea.vmem [#allocation2], 34
    %625 = vst.msk [vmem:[%s624] ss:$8 sm:$0x3] %vm623, %v622
    %s626 = scalar_lea.vmem [#allocation3], 152
    %s627 = smov 3
    %v628 = vld [vmem:[%s626] ss:$2 sm:%s627]
    %vm629 = vcmask 523264
    %s630 = scalar_lea.vmem [#allocation2], 35
    %631 = vst.msk [vmem:[%s630] ss:$8 sm:$0x3] %vm629, %v628
    %s632 = scalar_lea.vmem [#allocation3], 160
    %s633 = smov 3
    %v634 = vld [vmem:[%s632] ss:$2 sm:%s633]
    %vm635 = vcmask 523264
    %s636 = scalar_lea.vmem [#allocation2], 36
    %637 = vst.msk [vmem:[%s636] ss:$8 sm:$0x3] %vm635, %v634
    %s638 = scalar_lea.vmem [#allocation3], 168
    %s639 = smov 3
    %v640 = vld [vmem:[%s638] ss:$2 sm:%s639]
    %vm641 = vcmask 523264
    %s642 = scalar_lea.vmem [#allocation2], 37
    %643 = vst.msk [vmem:[%s642] ss:$8 sm:$0x3] %vm641, %v640
    %s644 = scalar_lea.vmem [#allocation3], 176
    %s645 = smov 3
    %v646 = vld [vmem:[%s644] ss:$2 sm:%s645]
    %vm647 = vcmask 523264
    %s648 = scalar_lea.vmem [#allocation2], 38
    %649 = vst.msk [vmem:[%s648] ss:$8 sm:$0x3] %vm647, %v646
    %s650 = scalar_lea.vmem [#allocation3], 184
    %s651 = smov 3
    %v652 = vld [vmem:[%s650] ss:$2 sm:%s651]
    %vm653 = vcmask 523264
    %s654 = scalar_lea.vmem [#allocation2], 39
    %655 = vst.msk [vmem:[%s654] ss:$8 sm:$0x3] %vm653, %v652
    %s656 = scalar_lea.vmem [#allocation3], 192
    %s657 = smov 3
    %v658 = vld [vmem:[%s656] ss:$2 sm:%s657]
    %vm659 = vcmask 523264
    %s660 = scalar_lea.vmem [#allocation2], 48
    %661 = vst.msk [vmem:[%s660] ss:$8 sm:$0x3] %vm659, %v658
    %s662 = scalar_lea.vmem [#allocation3], 200
    %s663 = smov 3
    %v664 = vld [vmem:[%s662] ss:$2 sm:%s663]
    %vm665 = vcmask 523264
    %s666 = scalar_lea.vmem [#allocation2], 49
    %667 = vst.msk [vmem:[%s666] ss:$8 sm:$0x3] %vm665, %v664
    %s668 = scalar_lea.vmem [#allocation3], 208
    %s669 = smov 3
    %v670 = vld [vmem:[%s668] ss:$2 sm:%s669]
    %vm671 = vcmask 523264
    %s672 = scalar_lea.vmem [#allocation2], 50
    %673 = vst.msk [vmem:[%s672] ss:$8 sm:$0x3] %vm671, %v670
    %s674 = scalar_lea.vmem [#allocation3], 216
    %s675 = smov 3
    %v676 = vld [vmem:[%s674] ss:$2 sm:%s675]
    %vm677 = vcmask 523264
    %s678 = scalar_lea.vmem [#allocation2], 51
    %679 = vst.msk [vmem:[%s678] ss:$8 sm:$0x3] %vm677, %v676
    %s680 = scalar_lea.vmem [#allocation3], 224
    %s681 = smov 3
    %v682 = vld [vmem:[%s680] ss:$2 sm:%s681]
    %vm683 = vcmask 523264
    %s684 = scalar_lea.vmem [#allocation2], 52
    %685 = vst.msk [vmem:[%s684] ss:$8 sm:$0x3] %vm683, %v682
    %s686 = scalar_lea.vmem [#allocation3], 232
    %s687 = smov 3
    %v688 = vld [vmem:[%s686] ss:$2 sm:%s687]
    %vm689 = vcmask 523264
    %s690 = scalar_lea.vmem [#allocation2], 53
    %691 = vst.msk [vmem:[%s690] ss:$8 sm:$0x3] %vm689, %v688
    %s692 = scalar_lea.vmem [#allocation3], 240
    %s693 = smov 3
    %v694 = vld [vmem:[%s692] ss:$2 sm:%s693]
    %vm695 = vcmask 523264
    %s696 = scalar_lea.vmem [#allocation2], 54
    %697 = vst.msk [vmem:[%s696] ss:$8 sm:$0x3] %vm695, %v694
    %s698 = scalar_lea.vmem [#allocation3], 248
    %s699 = smov 3
    %v700 = vld [vmem:[%s698] ss:$2 sm:%s699]
    %vm701 = vcmask 523264
    %s702 = scalar_lea.vmem [#allocation2], 55
    %703 = vst.msk [vmem:[%s702] ss:$8 sm:$0x3] %vm701, %v700
    %s704 = scalar_lea.vmem [#allocation3], 1
    %v705 = vld [vmem:[%s704] ss:$8 sm:$0xf]
    %s706 = scalar_lea.vmem [#allocation3], 1
    %v707 = vld [vmem:[%s706] ss:$8 sm:$0xf0]
    %vm708 = vcmask 1047556
    %v709 = vsel %vm708, %v707, %v705
    %710 = vrot.lane.b32.xlu0 %v709, 64
    %v711 = vpop.permute.xlu0 %710
    %vm712 = vcmask 1048064
    %713 = vst.msk [vmem:[#allocation2] sm:$0xff] %vm712, %v711
    %s714 = scalar_lea.vmem [#allocation3], 129
    %v715 = vld [vmem:[%s714] ss:$8 sm:$0xf]
    %s716 = scalar_lea.vmem [#allocation3], 129
    %v717 = vld [vmem:[%s716] ss:$8 sm:$0xf0]
    %vm718 = vcmask 1047556
    %v719 = vsel %vm718, %v717, %v715
    %720 = vrot.lane.b32.xlu0 %v719, 64
    %v721 = vpop.permute.xlu0 %720
    %vm722 = vcmask 1048064
    %s723 = scalar_lea.vmem [#allocation2], 32
    %724 = vst.msk [vmem:[%s723] sm:$0xff] %vm722, %v721
    %s725 = scalar_lea.vmem [#allocation3], 3
    %v726 = vld [vmem:[%s725] ss:$8 sm:$0xf]
    %s727 = scalar_lea.vmem [#allocation3], 3
    %v728 = vld [vmem:[%s727] ss:$8 sm:$0xf0]
    %vm729 = vcmask 1047556
    %v730 = vsel %vm729, %v728, %v726
    %731 = vrot.lane.b32.xlu0 %v730, 64
    %v732 = vpop.permute.xlu0 %731
    %vm733 = vcmask 1048064
    %s734 = scalar_lea.vmem [#allocation2], 8
    %735 = vst.msk [vmem:[%s734] sm:$0xff] %vm733, %v732
    %s736 = scalar_lea.vmem [#allocation3], 131
    %v737 = vld [vmem:[%s736] ss:$8 sm:$0xf]
    %s738 = scalar_lea.vmem [#allocation3], 131
    %v739 = vld [vmem:[%s738] ss:$8 sm:$0xf0]
    %vm740 = vcmask 1047556
    %v741 = vsel %vm740, %v739, %v737
    %742 = vrot.lane.b32.xlu0 %v741, 64
    %v743 = vpop.permute.xlu0 %742
    %vm744 = vcmask 1048064
    %s745 = scalar_lea.vmem [#allocation2], 40
    %746 = vst.msk [vmem:[%s745] sm:$0xff] %vm744, %v743
    %s747 = scalar_lea.vmem [#allocation3], 65
    %v748 = vld [vmem:[%s747] ss:$8 sm:$0xf]
    %s749 = scalar_lea.vmem [#allocation3], 65
    %v750 = vld [vmem:[%s749] ss:$8 sm:$0xf0]
    %vm751 = vcmask 1047556
    %v752 = vsel %vm751, %v750, %v748
    %753 = vrot.lane.b32.xlu0 %v752, 64
    %v754 = vpop.permute.xlu0 %753
    %vm755 = vcmask 1048064
    %s756 = scalar_lea.vmem [#allocation2], 16
    %757 = vst.msk [vmem:[%s756] sm:$0xff] %vm755, %v754
    %s758 = scalar_lea.vmem [#allocation3], 193
    %v759 = vld [vmem:[%s758] ss:$8 sm:$0xf]
    %s760 = scalar_lea.vmem [#allocation3], 193
    %v761 = vld [vmem:[%s760] ss:$8 sm:$0xf0]
    %vm762 = vcmask 1047556
    %v763 = vsel %vm762, %v761, %v759
    %764 = vrot.lane.b32.xlu0 %v763, 64
    %v765 = vpop.permute.xlu0 %764
    %vm766 = vcmask 1048064
    %s767 = scalar_lea.vmem [#allocation2], 48
    %768 = vst.msk [vmem:[%s767] sm:$0xff] %vm766, %v765
    %s769 = scalar_lea.vmem [#allocation3], 67
    %v770 = vld [vmem:[%s769] ss:$8 sm:$0xf]
    %s771 = scalar_lea.vmem [#allocation3], 67
    %v772 = vld [vmem:[%s771] ss:$8 sm:$0xf0]
    %vm773 = vcmask 1047556
    %v774 = vsel %vm773, %v772, %v770
    %775 = vrot.lane.b32.xlu0 %v774, 64
    %v776 = vpop.permute.xlu0 %775
    %vm777 = vcmask 1048064
    %s778 = scalar_lea.vmem [#allocation2], 24
    %779 = vst.msk [vmem:[%s778] sm:$0xff] %vm777, %v776
    %s780 = scalar_lea.vmem [#allocation3], 195
    %v781 = vld [vmem:[%s780] ss:$8 sm:$0xf]
    %s782 = scalar_lea.vmem [#allocation3], 195
    %v783 = vld [vmem:[%s782] ss:$8 sm:$0xf0]
    %vm784 = vcmask 1047556
    %v785 = vsel %vm784, %v783, %v781
    %786 = vrot.lane.b32.xlu0 %v785, 64
    %v787 = vpop.permute.xlu0 %786
    %vm788 = vcmask 1048064
    %s789 = scalar_lea.vmem [#allocation2], 56
    %790 = vst.msk [vmem:[%s789] sm:$0xff] %vm788, %v787
    %s792 = smul.u32 4, 2
    %s793 = sshllo.u32 0, %s792
    %s794 = sshrl.u32 %s792, 1
    %v795 = vld [vmem:[#allocation2] sm:%s793]
    %v796 = vpack.c.bf16 0.0, %v795
    %s797 = sshllo.u32 0, %s794
    %798 = vst [vmem:[#allocation0] sm:%s797] %v796
    %s799 = scalar_lea.vmem [#allocation2], 8
    %v800 = vld [vmem:[%s799] sm:%s793]
    %v801 = vpack.c.bf16 0.0, %v800
    %s802 = sshllo.u32 0, %s794
    %s803 = scalar_lea.vmem [#allocation0], 4
    %804 = vst [vmem:[%s803] sm:%s802] %v801
    %s805 = scalar_lea.vmem [#allocation2], 16
    %v806 = vld [vmem:[%s805] sm:%s793]
    %v807 = vpack.c.bf16 0.0, %v806
    %s808 = sshllo.u32 0, %s794
    %s809 = smul.addr 4, 2
    %s810 = scalar_lea.vmem [#allocation0], %s809
    %811 = vst [vmem:[%s810] sm:%s808] %v807
    %s812 = scalar_lea.vmem [#allocation2], 24
    %v813 = vld [vmem:[%s812] sm:%s793]
    %v814 = vpack.c.bf16 0.0, %v813
    %s815 = sshllo.u32 0, %s794
    %s816 = smul.addr 4, 3
    %s817 = scalar_lea.vmem [#allocation0], %s816
    %818 = vst [vmem:[%s817] sm:%s815] %v814
    %s819 = scalar_lea.vmem [#allocation2], 32
    %v820 = vld [vmem:[%s819] sm:%s793]
    %v821 = vpack.c.bf16 0.0, %v820
    %s822 = sshllo.u32 0, %s794
    %s823 = smul.addr 4, 4
    %s824 = scalar_lea.vmem [#allocation0], %s823
    %825 = vst [vmem:[%s824] sm:%s822] %v821
    %s826 = scalar_lea.vmem [#allocation2], 40
    %v827 = vld [vmem:[%s826] sm:%s793]
    %v828 = vpack.c.bf16 0.0, %v827
    %s829 = sshllo.u32 0, %s794
    %s830 = smul.addr 4, 5
    %s831 = scalar_lea.vmem [#allocation0], %s830
    %832 = vst [vmem:[%s831] sm:%s829] %v828
    %s833 = scalar_lea.vmem [#allocation2], 48
    %v834 = vld [vmem:[%s833] sm:%s793]
    %v835 = vpack.c.bf16 0.0, %v834
    %s836 = sshllo.u32 0, %s794
    %s837 = smul.addr 4, 6
    %s838 = scalar_lea.vmem [#allocation0], %s837
    %839 = vst [vmem:[%s838] sm:%s836] %v835
    %s840 = scalar_lea.vmem [#allocation2], 56
    %v841 = vld [vmem:[%s840] sm:%s793]
    %v842 = vpack.c.bf16 0.0, %v841
    %s843 = sshllo.u32 0, %s794
    %s844 = smul.addr 4, 7
    %s845 = scalar_lea.vmem [#allocation0], %s844
    %846 = vst [vmem:[%s845] sm:%s843] %v842
    %s848 = ssub.s32 512, 512
    %849 = vsyncadd [#allocation1], %s848
    %s851 = sshll.u32 [#allocation0], 4
    %s852 = int_to_ptr.vmem [resolvable:$true] %s851
    %854 = dma.vmem_to_hbm [thread:$0]  %s852, 512, %s1, [#allocation1]
    %855 = dma.done [#allocation1], 512
    %856 = vsyncpa [#allocation1], 1

// kernel: _lambda_.1
$region0: #{_lambda_.1}
  #allocation0 [shape = 'u32[]', space=smem, size = 0x4, offset = 0x4, fixed_abs, tag = 'smem constant byte address 0x4 - core index']
  #allocation1 [shape = 'u32[144,128]{1,0:T(1,128)}', space=vmem, size = 0x12000, scoped, tag = 'internal scratch']
  %s0 = inlined_call_operand.hbm [shape: bf16[8,32], index: 0, kind: input, shape index: {}]
  %s1 = inlined_call_operand.hbm [shape: f32[8,64], index: 1, kind: input, shape index: {}]
  %s2 = inlined_call_operand.hbm [shape: bf16[32,256], index: 2, kind: input, shape index: {}]
  %s3 = inlined_call_operand.hbm [shape: bf16[2,32,256], index: 3, kind: input, shape index: {}]
  %s4 = inlined_call_operand.hbm [shape: f32[2,4,64], index: 4, kind: input, shape index: {}]
  %s5 = inlined_call_operand.hbm [shape: bf16[64,10], index: 5, kind: input, shape index: {}]
  %s6 = inlined_call_operand.hbm [shape: bf16[64,10], index: 6, kind: input, shape index: {}]
  %s7 = inlined_call_operand.hbm [shape: bf16[8,64,10], index: 7, kind: input, shape index: {}]
  %s8 = inlined_call_operand.hbm [shape: f32[2,4,10], index: 8, kind: input, shape index: {}]
  %s9 = inlined_call_operand.hbm [shape: f32[64,10], index: 9, kind: output, shape index: {}]
  %s10 = sld [smem:[#allocation0]]
  $region105: #{_lambda_.1} parent=0
    _
  %s12 = ssub.s32 1, %s10
  %s13 = scalar_select 0, %s12, %s10
  $region1: #{_lambda_.1} parent=0
    #allocation2 [shape = 'u8[2048]{0}', space=vmem, size = 0x800, scoped, tag = 'input window, operand 0, single buffered']
    #allocation3 [shape = 's32[2]{0}', space=sflag, size = 0x8, scoped, tag = 'scoped memory for _lambda_.1']
    #allocation4 [shape = 's32[2]{0}', space=sflag, size = 0x8, scoped, tag = 'scoped memory for _lambda_.1']
    #allocation5 [shape = 'u8[4096]{0}', space=vmem, size = 0x1000, scoped, tag = 'input window, operand 1, single buffered']
    #allocation6 [shape = 's32[1]{0}', space=sflag, size = 0x4, scoped, tag = 'scoped memory for _lambda_.1']
    #allocation7 [shape = 'u8[16384]{0}', space=vmem, size = 0x4000, scoped, tag = 'input window, operand 2, single buffered']
    #allocation8 [shape = 'u8[32768]{0}', space=vmem, size = 0x8000, scoped, tag = 'input window, operand 3']
    #allocation9 [shape = 's32[2]{0}', space=sflag, size = 0x8, scoped, tag = 'scoped memory for _lambda_.1']
    #allocation10 [shape = 'u8[4096]{0}', space=vmem, size = 0x1000, scoped, tag = 'input window, operand 4']
    #allocation11 [shape = 'u8[16384]{0}', space=vmem, size = 0x4000, scoped, tag = 'input window, operand 5, single buffered']
    #allocation12 [shape = 's32[1]{0}', space=sflag, size = 0x4, scoped, tag = 'scoped memory for _lambda_.1']
    #allocation13 [shape = 'u8[16384]{0}', space=vmem, size = 0x4000, scoped, tag = 'input window, operand 6, single buffered']
    #allocation14 [shape = 'u8[131072]{0}', space=vmem, size = 0x20000, scoped, tag = 'input window, operand 7']
    #allocation15 [shape = 's32[2]{0}', space=sflag, size = 0x8, scoped, tag = 'scoped memory for _lambda_.1']
    #allocation16 [shape = 'u8[4096]{0}', space=vmem, size = 0x1000, scoped, tag = 'input window, operand 8']
    #allocation17 [shape = 'u8[32768]{0}', space=vmem, size = 0x8000, scoped, tag = 'output window, operand 0']
    %14 = vsyncpa [#allocation3], 0
    %15 = vsyncpa [#allocation6], 0
    %16 = vsyncpa [#allocation9], 0
    %s17 = scalar_lea.sflag [#allocation9], 1
    %18 = vsyncpa %s17, 0
    %19 = vsyncpa [#allocation12], 0
    %20 = vsyncpa [#allocation15], 0
    %s21 = scalar_lea.sflag [#allocation15], 1
    %22 = vsyncpa %s21, 0
    %23 = vsyncpa [#allocation4], 0
    %s24 = scalar_lea.sflag [#allocation4], 1
    %25 = vsyncpa %s24, 0
    loop: start=0, step=1, limit=4
    $region2: #{_lambda_.1} parent=1 // loop_pre_header
      _
    $region3: #{_lambda_.1} parent=1 // loop_header
      %s27 = sphi 0, %s31
      %p28 = scmp.ge.s32.totalorder %s27, 4
      %s35 = sphi 0, %s35
      %s37 = sphi 0, %s35
      %s38 = sphi 0, %s37
      %s52 = sphi 0, %s38
      %s56 = sphi 0, %s56
      %s58 = sphi 0, %s56
      %s59 = sphi 0, %s58
      %s73 = sphi 0, %s59
      %s77 = sphi 0, %s77
      %s79 = sphi 0, %s77
      %s80 = sphi 0, %s79
      %s94 = sphi 0, %s80
      %s100 = sphi 0, %s102
      %s103 = sphi 0, %s100
      %s104 = sphi 0, %s103
      %s120 = sphi 0, %s104
      %s126 = sphi 0, %s128
      %s129 = sphi 0, %s126
      %s130 = sphi 0, %s129
      %s146 = sphi 0, %s130
      %s150 = sphi 0, %s150
      %s152 = sphi 0, %s150
      %s153 = sphi 0, %s152
      %s167 = sphi 0, %s153
      %s171 = sphi 0, %s171
      %s173 = sphi 0, %s171
      %s174 = sphi 0, %s173
      %s188 = sphi 0, %s174
      %s194 = sphi 0, %s196
      %s197 = sphi 0, %s194
      %s198 = sphi 0, %s197
      %s214 = sphi 0, %s198
      %s220 = sphi 0, %s222
      %s223 = sphi 0, %s220
      %s224 = sphi 0, %s223
      %s240 = sphi 0, %s224
      %s246 = sphi 0, %s248
      %s249 = sphi 0, %s246
      %s250 = sphi 0, %s249
      %s266 = sphi 0, %s250
    $region4: #{_lambda_.1} parent=1 // loop_header_branch
      %30 = sbr.rel (%p28) target = $region8
    $region5: #{_lambda_.1} parent=1 // loop_body
      %s32 = ssub.s32 %s27, 1
      %s33 = ssub.s32 %s27, 2
      %s34 = sadd.s32 %s27, 1
      %s36 = sadd.s32 %s35, 1
      %p39 = scmp.eq.s32.totalorder %s27, 1
      %p40 = scmp.ne.s32.totalorder %s35, %s37
      %p41 = scmp.eq.s32.totalorder %s27, 0
      %p42 = por %p40, %p41
      %p43 = scmp.ne.s32.totalorder %s35, %s37
      %p44 = scmp.eq.s32.totalorder %s32, 1
      %p45 = por %p43, %p44
      %p46 = scmp.ne.s32.totalorder %s37, %s38
      %p47 = scmp.eq.s32.totalorder %s32, 0
      %p48 = por %p46, %p47
      %p49 = scmp.ne.s32.totalorder %s37, %s38
      %p50 = scmp.eq.s32.totalorder %s33, 1
      %p51 = por %p49, %p50
      %p53 = scmp.ne.s32.totalorder %s38, %s52
      %p54 = scmp.eq.s32.totalorder %s33, 0
      %p55 = por %p53, %p54
      %s57 = sadd.s32 %s56, 1
      %p60 = scmp.eq.s32.totalorder %s27, 1
      %p61 = scmp.ne.s32.totalorder %s56, %s58
      %p62 = scmp.eq.s32.totalorder %s27, 0
      %p63 = por %p61, %p62
      %p64 = scmp.ne.s32.totalorder %s56, %s58
      %p65 = scmp.eq.s32.totalorder %s32, 1
      %p66 = por %p64, %p65
      %p67 = scmp.ne.s32.totalorder %s58, %s59
      %p68 = scmp.eq.s32.totalorder %s32, 0
      %p69 = por %p67, %p68
      %p70 = scmp.ne.s32.totalorder %s58, %s59
      %p71 = scmp.eq.s32.totalorder %s33, 1
      %p72 = por %p70, %p71
      %p74 = scmp.ne.s32.totalorder %s59, %s73
      %p75 = scmp.eq.s32.totalorder %s33, 0
      %p76 = por %p74, %p75
      %s78 = sadd.s32 %s77, 1
      %p81 = scmp.eq.s32.totalorder %s27, 1
      %p82 = scmp.ne.s32.totalorder %s77, %s79
      %p83 = scmp.eq.s32.totalorder %s27, 0
      %p84 = por %p82, %p83
      %p85 = scmp.ne.s32.totalorder %s77, %s79
      %p86 = scmp.eq.s32.totalorder %s32, 1
      %p87 = por %p85, %p86
      %p88 = scmp.ne.s32.totalorder %s79, %s80
      %p89 = scmp.eq.s32.totalorder %s32, 0
      %p90 = por %p88, %p89
      %p91 = scmp.ne.s32.totalorder %s79, %s80
      %p92 = scmp.eq.s32.totalorder %s33, 1
      %p93 = por %p91, %p92
      %p95 = scmp.ne.s32.totalorder %s80, %s94
      %p96 = scmp.eq.s32.totalorder %s33, 0
      %p97 = por %p95, %p96
      %s98 = ssub.s32 %s27, %s34
      %p99 = scmp.eq.s32.totalorder %s98, 0
      %s101 = sadd.s32 %s100, 1
      %s102 = scalar_select %p99, %s100, %s101
      %p105 = pneg %p99
      %p106 = scmp.eq.s32.totalorder %s27, 1
      %p107 = por %p105, %p106
      %p108 = scmp.ne.s32.totalorder %s100, %s103
      %p109 = scmp.eq.s32.totalorder %s27, 0
      %p110 = por %p108, %p109
      %p111 = scmp.ne.s32.totalorder %s100, %s103
      %p112 = scmp.eq.s32.totalorder %s32, 1
      %p113 = por %p111, %p112
      %p114 = scmp.ne.s32.totalorder %s103, %s104
      %p115 = scmp.eq.s32.totalorder %s32, 0
      %p116 = por %p114, %p115
      %p117 = scmp.ne.s32.totalorder %s103, %s104
      %p118 = scmp.eq.s32.totalorder %s33, 1
      %p119 = por %p117, %p118
      %p121 = scmp.ne.s32.totalorder %s104, %s120
      %p122 = scmp.eq.s32.totalorder %s33, 0
      %p123 = por %p121, %p122
      %s124 = ssub.s32 %s27, %s34
      %p125 = scmp.eq.s32.totalorder %s124, 0
      %s127 = sadd.s32 %s126, 1
      %s128 = scalar_select %p125, %s126, %s127
      %p131 = pneg %p125
      %p132 = scmp.eq.s32.totalorder %s27, 1
      %p133 = por %p131, %p132
      %p134 = scmp.ne.s32.totalorder %s126, %s129
      %p135 = scmp.eq.s32.totalorder %s27, 0
      %p136 = por %p134, %p135
      %p137 = scmp.ne.s32.totalorder %s126, %s129
      %p138 = scmp.eq.s32.totalorder %s32, 1
      %p139 = por %p137, %p138
      %p140 = scmp.ne.s32.totalorder %s129, %s130
      %p141 = scmp.eq.s32.totalorder %s32, 0
      %p142 = por %p140, %p141
      %p143 = scmp.ne.s32.totalorder %s129, %s130
      %p144 = scmp.eq.s32.totalorder %s33, 1
      %p145 = por %p143, %p144
      %p147 = scmp.ne.s32.totalorder %s130, %s146
      %p148 = scmp.eq.s32.totalorder %s33, 0
      %p149 = por %p147, %p148
      %s151 = sadd.s32 %s150, 1
      %p154 = scmp.eq.s32.totalorder %s27, 1
      %p155 = scmp.ne.s32.totalorder %s150, %s152
      %p156 = scmp.eq.s32.totalorder %s27, 0
      %p157 = por %p155, %p156
      %p158 = scmp.ne.s32.totalorder %s150, %s152
      %p159 = scmp.eq.s32.totalorder %s32, 1
      %p160 = por %p158, %p159
      %p161 = scmp.ne.s32.totalorder %s152, %s153
      %p162 = scmp.eq.s32.totalorder %s32, 0
      %p163 = por %p161, %p162
      %p164 = scmp.ne.s32.totalorder %s152, %s153
      %p165 = scmp.eq.s32.totalorder %s33, 1
      %p166 = por %p164, %p165
      %p168 = scmp.ne.s32.totalorder %s153, %s167
      %p169 = scmp.eq.s32.totalorder %s33, 0
      %p170 = por %p168, %p169
      %s172 = sadd.s32 %s171, 1
      %p175 = scmp.eq.s32.totalorder %s27, 1
      %p176 = scmp.ne.s32.totalorder %s171, %s173
      %p177 = scmp.eq.s32.totalorder %s27, 0
      %p178 = por %p176, %p177
      %p179 = scmp.ne.s32.totalorder %s171, %s173
      %p180 = scmp.eq.s32.totalorder %s32, 1
      %p181 = por %p179, %p180
      %p182 = scmp.ne.s32.totalorder %s173, %s174
      %p183 = scmp.eq.s32.totalorder %s32, 0
      %p184 = por %p182, %p183
      %p185 = scmp.ne.s32.totalorder %s173, %s174
      %p186 = scmp.eq.s32.totalorder %s33, 1
      %p187 = por %p185, %p186
      %p189 = scmp.ne.s32.totalorder %s174, %s188
      %p190 = scmp.eq.s32.totalorder %s33, 0
      %p191 = por %p189, %p190
      %s192 = ssub.s32 %s27, %s34
      %p193 = scmp.eq.s32.totalorder %s192, 0
      %s195 = sadd.s32 %s194, 1
      %s196 = scalar_select %p193, %s194, %s195
      %p199 = pneg %p193
      %p200 = scmp.eq.s32.totalorder %s27, 1
      %p201 = por %p199, %p200
      %p202 = scmp.ne.s32.totalorder %s194, %s197
      %p203 = scmp.eq.s32.totalorder %s27, 0
      %p204 = por %p202, %p203
      %p205 = scmp.ne.s32.totalorder %s194, %s197
      %p206 = scmp.eq.s32.totalorder %s32, 1
      %p207 = por %p205, %p206
      %p208 = scmp.ne.s32.totalorder %s197, %s198
      %p209 = scmp.eq.s32.totalorder %s32, 0
      %p210 = por %p208, %p209
      %p211 = scmp.ne.s32.totalorder %s197, %s198
      %p212 = scmp.eq.s32.totalorder %s33, 1
      %p213 = por %p211, %p212
      %p215 = scmp.ne.s32.totalorder %s198, %s214
      %p216 = scmp.eq.s32.totalorder %s33, 0
      %p217 = por %p215, %p216
      %s218 = ssub.s32 %s27, %s34
      %p219 = scmp.eq.s32.totalorder %s218, 0
      %s221 = sadd.s32 %s220, 1
      %s222 = scalar_select %p219, %s220, %s221
      %p225 = pneg %p219
      %p226 = scmp.eq.s32.totalorder %s27, 1
      %p227 = por %p225, %p226
      %p228 = scmp.ne.s32.totalorder %s220, %s223
      %p229 = scmp.eq.s32.totalorder %s27, 0
      %p230 = por %p228, %p229
      %p231 = scmp.ne.s32.totalorder %s220, %s223
      %p232 = scmp.eq.s32.totalorder %s32, 1
      %p233 = por %p231, %p232
      %p234 = scmp.ne.s32.totalorder %s223, %s224
      %p235 = scmp.eq.s32.totalorder %s32, 0
      %p236 = por %p234, %p235
      %p237 = scmp.ne.s32.totalorder %s223, %s224
      %p238 = scmp.eq.s32.totalorder %s33, 1
      %p239 = por %p237, %p238
      %p241 = scmp.ne.s32.totalorder %s224, %s240
      %p242 = scmp.eq.s32.totalorder %s33, 0
      %p243 = por %p241, %p242
      %s244 = ssub.s32 %s27, %s34
      %p245 = scmp.eq.s32.totalorder %s244, 0
      %s247 = sadd.s32 %s246, 1
      %s248 = scalar_select %p245, %s246, %s247
      %p251 = pneg %p245
      %p252 = scmp.eq.s32.totalorder %s27, 1
      %p253 = por %p251, %p252
      %p254 = scmp.ne.s32.totalorder %s246, %s249
      %p255 = scmp.eq.s32.totalorder %s27, 0
      %p256 = por %p254, %p255
      %p257 = scmp.ne.s32.totalorder %s246, %s249
      %p258 = scmp.eq.s32.totalorder %s32, 1
      %p259 = por %p257, %p258
      %p260 = scmp.ne.s32.totalorder %s249, %s250
      %p261 = scmp.eq.s32.totalorder %s32, 0
      %p262 = por %p260, %p261
      %p263 = scmp.ne.s32.totalorder %s249, %s250
      %p264 = scmp.eq.s32.totalorder %s33, 1
      %p265 = por %p263, %p264
      %p267 = scmp.ne.s32.totalorder %s250, %s266
      %p268 = scmp.eq.s32.totalorder %s33, 0
      %p269 = por %p267, %p268
      %p270 = scmp.le.s32.totalorder 1, %s27
      %p271 = scmp.lt.s32.totalorder %s27, 3
      %p272 = pnand %p270, %p271
      %p273 = pneg %p272
      // Predicated region
      $region9: #{_lambda_.1} parent=5 // pred_check
        _
      $region10: #{_lambda_.1} parent=5 // pred_check_branch
        %275 = sbr.rel (%p272) target = $region12
      $region11: #{_lambda_.1} parent=5 // pred_region
        %s276 = ssub.s32 %s27, 1
        // Predicated region
        $region13: #{_lambda_.1} parent=11 // pred_check
          %p277 = pneg %p48
        $region14: #{_lambda_.1} parent=11 // pred_check_branch
          %279 = sbr.rel (%p277) target = $region16
        $region15: #{_lambda_.1} parent=11 // pred_region
          %s281 = ssub.s32 64, 64
          %282 = vsyncadd [#allocation3], %s281
          %s284 = sshll.u32 [#allocation2], 4
          %s285 = int_to_ptr.vmem [resolvable:$true] %s284
          %287 = dma.hbm_to_vmem [thread:$0]  %s0, 64, %s285, [#allocation3]
        $region16: #{_lambda_.1} parent=11 // pred_fallthru
          _
        // Predicated region
        $region17: #{_lambda_.1} parent=11 // pred_check
          %p288 = pneg %p69
        $region18: #{_lambda_.1} parent=11 // pred_check_branch
          %290 = sbr.rel (%p288) target = $region20
        $region19: #{_lambda_.1} parent=11 // pred_region
          %s292 = ssub.s32 128, 128
          %293 = vsyncadd [#allocation6], %s292
          %s295 = sshll.u32 [#allocation5], 4
          %s296 = int_to_ptr.vmem [resolvable:$true] %s295
          %298 = dma.hbm_to_vmem [thread:$0]  %s1, 128, %s296, [#allocation6]
        $region20: #{_lambda_.1} parent=11 // pred_fallthru
          _
        // Predicated region
        $region21: #{_lambda_.1} parent=11 // pred_check
          %p299 = pneg %p90
        $region22: #{_lambda_.1} parent=11 // pred_check_branch
          %301 = sbr.rel (%p299) target = $region24
        $region23: #{_lambda_.1} parent=11 // pred_region
          %s303 = ssub.s32 512, 512
          %304 = vsyncadd [#allocation6], %s303
          %s305 = sshll.u32 [#allocation7], 4
          %s306 = int_to_ptr.vmem [resolvable:$true] %s305
          %311 = dma.hbm_to_vmem [thread:$0]  %s2, 512, %s306, [#allocation6], 128, 128, 8
        $region24: #{_lambda_.1} parent=11 // pred_fallthru
          _
        // Predicated region
        $region25: #{_lambda_.1} parent=11 // pred_check
          %p312 = pneg %p163
        $region26: #{_lambda_.1} parent=11 // pred_check_branch
          %314 = sbr.rel (%p312) target = $region28
        $region27: #{_lambda_.1} parent=11 // pred_region
          %s316 = ssub.s32 512, 512
          %317 = vsyncadd [#allocation12], %s316
          %s318 = sshll.u32 [#allocation11], 4
          %s319 = int_to_ptr.vmem [resolvable:$true] %s318
          %324 = dma.hbm_to_vmem [thread:$0]  %s5, 512, %s319, [#allocation12], 64, 64, 4
        $region28: #{_lambda_.1} parent=11 // pred_fallthru
          _
        // Predicated region
        $region29: #{_lambda_.1} parent=11 // pred_check
          %p325 = pneg %p184
        $region30: #{_lambda_.1} parent=11 // pred_check_branch
          %327 = sbr.rel (%p325) target = $region32
        $region31: #{_lambda_.1} parent=11 // pred_region
          %s329 = ssub.s32 512, 512
          %330 = vsyncadd [#allocation12], %s329
          %s331 = sshll.u32 [#allocation13], 4
          %s332 = int_to_ptr.vmem [resolvable:$true] %s331
          %337 = dma.hbm_to_vmem [thread:$0]  %s6, 512, %s332, [#allocation12], 64, 64, 4
        $region32: #{_lambda_.1} parent=11 // pred_fallthru
          _
      $region12: #{_lambda_.1} parent=5 // pred_fallthru
        _
      %p338 = scmp.lt.s32.totalorder %s27, 2
      // Predicated region
      $region33: #{_lambda_.1} parent=5 // pred_check
        %p339 = pneg %p338
      $region34: #{_lambda_.1} parent=5 // pred_check_branch
        %341 = sbr.rel (%p339) target = $region36
      $region35: #{_lambda_.1} parent=5 // pred_region
        // Predicated region
        $region37: #{_lambda_.1} parent=35 // pred_check
          %p342 = pneg %p110
        $region38: #{_lambda_.1} parent=35 // pred_check_branch
          %344 = sbr.rel (%p342) target = $region40
        $region39: #{_lambda_.1} parent=35 // pred_region
          %s345 = sand.u32 %s27, 1
          %s346 = scalar_lea.sflag [#allocation9], %s345
          %s347 = sand.u32 %s100, 1
          %s348 = smul.addr %s347, 32
          %s349 = scalar_lea.vmem [#allocation8], %s348
          %s351 = ssub.s32 512, 512
          %352 = vsyncadd %s346, %s351
          %s353 = smul.addr %s27, 8
          %s354 = smul.addr %s353, 64
          %s355 = scalar_lea.hbm %s3, %s354
          %s356 = sshll.u32 %s349, 4
          %s357 = int_to_ptr.vmem [resolvable:$true] %s356
          %362 = dma.hbm_to_vmem [thread:$0]  %s355, 512, %s357, %s346, 128, 128, 8
        $region40: #{_lambda_.1} parent=35 // pred_fallthru
          _
        // Predicated region
        $region41: #{_lambda_.1} parent=35 // pred_check
          %p363 = pneg %p136
        $region42: #{_lambda_.1} parent=35 // pred_check_branch
          %365 = sbr.rel (%p363) target = $region44
        $region43: #{_lambda_.1} parent=35 // pred_region
          %s366 = sand.u32 %s27, 1
          %s367 = scalar_lea.sflag [#allocation9], %s366
          %s368 = sand.u32 %s126, 1
          %s369 = smul.addr %s368, 4
          %s370 = scalar_lea.vmem [#allocation10], %s369
          %s372 = ssub.s32 64, 64
          %373 = vsyncadd %s367, %s372
          %s374 = smul.addr %s27, 64
          %s375 = scalar_lea.hbm %s4, %s374
          %s377 = sshll.u32 %s370, 4
          %s378 = int_to_ptr.vmem [resolvable:$true] %s377
          %380 = dma.hbm_to_vmem [thread:$0]  %s375, 64, %s378, %s367
        $region44: #{_lambda_.1} parent=35 // pred_fallthru
          _
        // Predicated region
        $region45: #{_lambda_.1} parent=35 // pred_check
          %p381 = pneg %p204
        $region46: #{_lambda_.1} parent=35 // pred_check_branch
          %383 = sbr.rel (%p381) target = $region48
        $region47: #{_lambda_.1} parent=35 // pred_region
          %s384 = sand.u32 %s27, 1
          %s385 = scalar_lea.sflag [#allocation15], %s384
          %s386 = sand.u32 %s194, 1
          %s387 = smul.addr %s386, 128
          %s388 = scalar_lea.vmem [#allocation14], %s387
          %s389 = smul.u32 4, %s27
          %s391 = ssub.s32 2048, 2048
          %392 = vsyncadd %s385, %s391
          %s393 = smul.addr %s389, 8
          %s394 = smul.addr %s393, 64
          %s395 = scalar_lea.hbm %s7, %s394
          %s396 = sshll.u32 %s388, 4
          %s397 = int_to_ptr.vmem [resolvable:$true] %s396
          %402 = dma.hbm_to_vmem [thread:$0]  %s395, 2048, %s397, %s385, 64, 64, 4
        $region48: #{_lambda_.1} parent=35 // pred_fallthru
          _
        // Predicated region
        $region49: #{_lambda_.1} parent=35 // pred_check
          %p403 = pneg %p230
        $region50: #{_lambda_.1} parent=35 // pred_check_branch
          %405 = sbr.rel (%p403) target = $region52
        $region51: #{_lambda_.1} parent=35 // pred_region
          %s406 = sand.u32 %s27, 1
          %s407 = scalar_lea.sflag [#allocation15], %s406
          %s408 = sand.u32 %s220, 1
          %s409 = smul.addr %s408, 4
          %s410 = scalar_lea.vmem [#allocation16], %s409
          %s412 = ssub.s32 64, 64
          %413 = vsyncadd %s407, %s412
          %s414 = smul.addr %s27, 64
          %s415 = scalar_lea.hbm %s8, %s414
          %s417 = sshll.u32 %s410, 4
          %s418 = int_to_ptr.vmem [resolvable:$true] %s417
          %420 = dma.hbm_to_vmem [thread:$0]  %s415, 64, %s418, %s407
        $region52: #{_lambda_.1} parent=35 // pred_fallthru
          _
      $region36: #{_lambda_.1} parent=5 // pred_fallthru
        _
      %p421 = scmp.le.s32.totalorder 1, %s27
      %p422 = scmp.lt.s32.totalorder %s27, 3
      %p423 = pnand %p421, %p422
      %p424 = pneg %p423
      // Predicated region
      $region53: #{_lambda_.1} parent=5 // pred_check
        _
      $region54: #{_lambda_.1} parent=5 // pred_check_branch
        %426 = sbr.rel (%p423) target = $region56
      $region55: #{_lambda_.1} parent=5 // pred_region
        %s427 = ssub.s32 %s27, 1
        // Predicated region
        $region57: #{_lambda_.1} parent=55 // pred_check
          %p428 = pneg %p48
        $region58: #{_lambda_.1} parent=55 // pred_check_branch
          %430 = sbr.rel (%p428) target = $region60
        $region59: #{_lambda_.1} parent=55 // pred_region
          %431 = dma.done [#allocation3], 64
        $region60: #{_lambda_.1} parent=55 // pred_fallthru
          _
        // Predicated region
        $region61: #{_lambda_.1} parent=55 // pred_check
          %p432 = pneg %p69
        $region62: #{_lambda_.1} parent=55 // pred_check_branch
          %434 = sbr.rel (%p432) target = $region64
        $region63: #{_lambda_.1} parent=55 // pred_region
          %435 = dma.done [#allocation6], 128
        $region64: #{_lambda_.1} parent=55 // pred_fallthru
          _
        // Predicated region
        $region65: #{_lambda_.1} parent=55 // pred_check
          %p436 = pneg %p90
        $region66: #{_lambda_.1} parent=55 // pred_check_branch
          %438 = sbr.rel (%p436) target = $region68
        $region67: #{_lambda_.1} parent=55 // pred_region
          %439 = dma.done [#allocation6], 512
        $region68: #{_lambda_.1} parent=55 // pred_fallthru
          _
        %s440 = sand.u32 %s32, 1
        %s441 = scalar_lea.sflag [#allocation9], %s440
        %s442 = sand.u32 %s103, 1
        %s443 = smul.addr %s442, 32
        %s444 = scalar_lea.vmem [#allocation8], %s443
        // Predicated region
        $region69: #{_lambda_.1} parent=55 // pred_check
          %p445 = pneg %p116
        $region70: #{_lambda_.1} parent=55 // pred_check_branch
          %447 = sbr.rel (%p445) target = $region72
        $region71: #{_lambda_.1} parent=55 // pred_region
          %448 = dma.done %s441, 512
        $region72: #{_lambda_.1} parent=55 // pred_fallthru
          _
        %s449 = sand.u32 %s32, 1
        %s450 = scalar_lea.sflag [#allocation9], %s449
        %s451 = sand.u32 %s129, 1
        %s452 = smul.addr %s451, 4
        %s453 = scalar_lea.vmem [#allocation10], %s452
        // Predicated region
        $region73: #{_lambda_.1} parent=55 // pred_check
          %p454 = pneg %p142
        $region74: #{_lambda_.1} parent=55 // pred_check_branch
          %456 = sbr.rel (%p454) target = $region76
        $region75: #{_lambda_.1} parent=55 // pred_region
          %457 = dma.done %s450, 64
        $region76: #{_lambda_.1} parent=55 // pred_fallthru
          _
        // Predicated region
        $region77: #{_lambda_.1} parent=55 // pred_check
          %p458 = pneg %p163
        $region78: #{_lambda_.1} parent=55 // pred_check_branch
          %460 = sbr.rel (%p458) target = $region80
        $region79: #{_lambda_.1} parent=55 // pred_region
          %461 = dma.done [#allocation12], 512
        $region80: #{_lambda_.1} parent=55 // pred_fallthru
          _
        // Predicated region
        $region81: #{_lambda_.1} parent=55 // pred_check
          %p462 = pneg %p184
        $region82: #{_lambda_.1} parent=55 // pred_check_branch
          %464 = sbr.rel (%p462) target = $region84
        $region83: #{_lambda_.1} parent=55 // pred_region
          %465 = dma.done [#allocation12], 512
        $region84: #{_lambda_.1} parent=55 // pred_fallthru
          _
        %s466 = sand.u32 %s32, 1
        %s467 = scalar_lea.sflag [#allocation15], %s466
        %s468 = sand.u32 %s197, 1
        %s469 = smul.addr %s468, 128
        %s470 = scalar_lea.vmem [#allocation14], %s469
        // Predicated region
        $region85: #{_lambda_.1} parent=55 // pred_check
          %p471 = pneg %p210
        $region86: #{_lambda_.1} parent=55 // pred_check_branch
          %473 = sbr.rel (%p471) target = $region88
        $region87: #{_lambda_.1} parent=55 // pred_region
          %474 = dma.done %s467, 2048
        $region88: #{_lambda_.1} parent=55 // pred_fallthru
          _
        %s475 = sand.u32 %s32, 1
        %s476 = scalar_lea.sflag [#allocation15], %s475
        %s477 = sand.u32 %s223, 1
        %s478 = smul.addr %s477, 4
        %s479 = scalar_lea.vmem [#allocation16], %s478
        // Predicated region
        $region89: #{_lambda_.1} parent=55 // pred_check
          %p480 = pneg %p236
        $region90: #{_lambda_.1} parent=55 // pred_check_branch
          %482 = sbr.rel (%p480) target = $region92
        $region91: #{_lambda_.1} parent=55 // pred_region
          %483 = dma.done %s476, 64
        $region92: #{_lambda_.1} parent=55 // pred_fallthru
          _
        %p484 = pneg %p48
        %p485 = pneg %p45
        %p486 = pneg %p69
        %p487 = pneg %p66
        %p488 = pneg %p90
        %p489 = pneg %p87
        %s490 = sand.u32 %s32, 1
        %s491 = scalar_lea.sflag [#allocation9], %s490
        %s492 = sand.u32 %s103, 1
        %s493 = smul.addr %s492, 32
        %s494 = scalar_lea.vmem [#allocation8], %s493
        %p495 = pneg %p116
        %p496 = pneg %p113
        %s497 = sand.u32 %s32, 1
        %s498 = scalar_lea.sflag [#allocation9], %s497
        %s499 = sand.u32 %s129, 1
        %s500 = smul.addr %s499, 4
        %s501 = scalar_lea.vmem [#allocation10], %s500
        %p502 = pneg %p142
        %p503 = pneg %p139
        %p504 = pneg %p163
        %p505 = pneg %p160
        %p506 = pneg %p184
        %p507 = pneg %p181
        %s508 = sand.u32 %s32, 1
        %s509 = scalar_lea.sflag [#allocation15], %s508
        %s510 = sand.u32 %s197, 1
        %s511 = smul.addr %s510, 128
        %s512 = scalar_lea.vmem [#allocation14], %s511
        %p513 = pneg %p210
        %p514 = pneg %p207
        %s515 = sand.u32 %s32, 1
        %s516 = scalar_lea.sflag [#allocation15], %s515
        %s517 = sand.u32 %s223, 1
        %s518 = smul.addr %s517, 4
        %s519 = scalar_lea.vmem [#allocation16], %s518
        %p520 = pneg %p236
        %p521 = pneg %p233
        %p522 = pneg %p262
        %p523 = pneg %p259
        %s524 = sand.u32 %s249, 1
        %s525 = scalar_lea.sflag [#allocation4], %s524
        %s526 = sand.u32 %s249, 1
        %s527 = smul.addr %s526, 32
        %s528 = scalar_lea.vmem [#allocation17], %s527
        %s529 = smul.u32 4, %s32
        %s530 = smul.u32 4, %s32
        %v532 = vld [vmem:[#allocation7] sm:$0xff]
        %v533 = vld [vmem:[#allocation7 + $0x8] sm:$0xff]
        %v534 = vld [vmem:[#allocation7 + $0x10] sm:$0xff]
        %v535 = vld [vmem:[#allocation7 + $0x18] sm:$0xff]
        %v536 = vld [vmem:[%s444] sm:$0xff]
        %v537 = vld [vmem:[%s444 + $0x8] sm:$0xff]
        %v538 = vld [vmem:[%s444 + $0x10] sm:$0xff]
        %v539 = vld [vmem:[%s444 + $0x18] sm:$0xff]
        %v540 = vmul.bf16 %v532, %v536
        %v541 = vmul.bf16 %v533, %v537
        %v542 = vmul.bf16 %v534, %v538
        %v543 = vmul.bf16 %v535, %v539
        %v544 = vld [vmem:[#allocation2] sm:$0xf]
        %v549 = vunpack.c.l.b16 %v540
        %v550 = vunpack.c.h.b16 %v540
        %v551 = vunpack.c.l.b16 %v541
        %v552 = vunpack.c.h.b16 %v541
        %v553 = vunpack.c.l.b16 %v542
        %v554 = vunpack.c.h.b16 %v542
        %v555 = vunpack.c.l.b16 %v543
        %v556 = vunpack.c.h.b16 %v543
        %v557 = vpack.c.b16 %v551, %v549
        %v558 = vpack.c.b16 %v552, %v550
        %v559 = vpack.c.b16 %v555, %v553
        %v560 = vpack.c.b16 %v556, %v554
        %vm565 = vcmask 261120
        %v567 = vsel %vm565, %v544, 0
        %569 = vmatprep.subr.bf16.mxu0 %v558
        %570 = vmatpush1.bf16.msra.mxu0 %v557
        %571 = vmatprep.subr.bf16.mxu0 %v560
        %572 = vmatpush1.bf16.msra.mxu0 %v559
        %573 = vmatprep.subr.bf16.mxu0 0
        %574 = vmatpush1.bf16.msra.mxu0 0
        %575 = vmatprep.subr.bf16.mxu0 0
        %576 = vmatpush1.bf16.msra.mxu0 0
        %577 = vmatprep.subr.bf16.mxu0 0
        %578 = vmatpush1.bf16.msra.mxu0 0
        %579 = vmatprep.subr.bf16.mxu0 0
        %580 = vmatpush1.bf16.msra.mxu0 0
        %581 = vmatprep.subr.bf16.mxu0 0
        %582 = vmatpush1.bf16.msra.mxu0 0
        %583 = vmatprep.subr.bf16.mxu0 0
        %584 = vmatpush1.bf16.msra.mxu0 0
        %585 = vmatprep.subr.bf16.mxu0 0
        %586 = vmatpush1.bf16.msra.mxu0 0
        %587 = vmatprep.subr.bf16.mxu0 0
        %588 = vmatpush1.bf16.msra.mxu0 0
        %589 = vmatprep.subr.bf16.mxu0 0
        %590 = vmatpush1.bf16.msra.mxu0 0
        %591 = vmatprep.subr.bf16.mxu0 0
        %592 = vmatpush1.bf16.msra.mxu0 0
        %593 = vmatprep.subr.bf16.mxu0 0
        %594 = vmatpush1.bf16.msra.mxu0 0
        %595 = vmatprep.subr.bf16.mxu0 0
        %596 = vmatpush1.bf16.msra.mxu0 0
        %597 = vmatprep.subr.bf16.mxu0 0
        %598 = vmatpush1.bf16.msra.mxu0 0
        %599 = vmatprep.subr.bf16.mxu0 0
        %600 = vmatpush1.bf16.msra.mxu0 0
        %601 = vmatprep.mubr.bf16.mxu0 0
        %602 = vmatmul.mubr.bf16.gmra.mrb[0].mxu0 %v567
        %v603 = vpop.f32.mrb[0].mxu0
        %v604 = vadd.f32 0.0, %v603
        %v605 = vpop.f32.mrb[0].mxu0
        %v606 = vadd.f32 0.0, %v605
        %v607 = vpop.f32.mrb[0].mxu0
        %v608 = vpop.f32.mrb[0].mxu0
        %609 = vdwg.mxu0
        %v610 = vld [vmem:[#allocation5] sm:$0xff]
        %v611 = vld [vmem:[%s453] sm:$0xf]
        %v612 = vadd.f32 %v604, %v610
        %v613 = vlaneseq
        %v614 = vshrl.u32 %v613, 7
        %v615 = vsub.s32 0, %v614
        %v616 = vrot.slane %v611, %v615
        %v617 = vadd.f32 %v612, %v616
        %619 = vrot.lane.b32.xlu0 %v610, 64
        %v620 = vpop.permute.xlu0 %619
        %v622 = vadd.f32 %v604, %v620
        %v623 = vlaneseq
        %v624 = vshrl.u32 %v623, 7
        %v625 = vsub.s32 1, %v624
        %v626 = vrot.slane %v611, %v625
        %628 = vrot.lane.b32.xlu0 %v626, 64
        %v629 = vpop.permute.xlu0 %628
        %v631 = vadd.f32 %v622, %v629
        %v632 = vadd.f32 %v606, %v610
        %v633 = vlaneseq
        %v634 = vshrl.u32 %v633, 7
        %v635 = vsub.s32 2, %v634
        %v636 = vrot.slane %v611, %v635
        %v637 = vadd.f32 %v632, %v636
        %v638 = vadd.f32 %v606, %v620
        %v639 = vlaneseq
        %v640 = vshrl.u32 %v639, 7
        %v641 = vsub.s32 3, %v640
        %v642 = vrot.slane %v611, %v641
        %644 = vrot.lane.b32.xlu0 %v642, 64
        %v645 = vpop.permute.xlu0 %644
        %v647 = vadd.f32 %v638, %v645
        %649 = vrot.lane.b32.xlu0 %v631, 64
        %v650 = vpop.permute.xlu0 %649
        %653 = vrot.lane.b32.xlu0 %v647, 64
        %v654 = vpop.permute.xlu0 %653
        %v656 = vmax.f32 %v617, 0.0
        %v657 = vmax.f32 %v650, 0.0
        %v658 = vmax.f32 %v637, 0.0
        %v659 = vmax.f32 %v654, 0.0
        %v660 = vpack.c.bf16 %v657, %v656
        %v661 = vpack.c.bf16 %v659, %v658
        %v662 = vld [vmem:[#allocation11] sm:$0xf]
        %v663 = vld [vmem:[#allocation11 + $0x4] sm:$0xf]
        %v664 = vld [vmem:[#allocation11 + $0x8] sm:$0xf]
        %v665 = vld [vmem:[#allocation11 + $0xc] sm:$0xf]
        %v666 = vld [vmem:[#allocation11 + $0x10] sm:$0xf]
        %v667 = vld [vmem:[#allocation11 + $0x14] sm:$0xf]
        %v668 = vld [vmem:[#allocation11 + $0x18] sm:$0xf]
        %v669 = vld [vmem:[#allocation11 + $0x1c] sm:$0xf]
        %v670 = vld [vmem:[#allocation13] sm:$0xf]
        %v671 = vld [vmem:[#allocation13 + $0x4] sm:$0xf]
        %v672 = vld [vmem:[#allocation13 + $0x8] sm:$0xf]
        %v673 = vld [vmem:[#allocation13 + $0xc] sm:$0xf]
        %v674 = vld [vmem:[#allocation13 + $0x10] sm:$0xf]
        %v675 = vld [vmem:[#allocation13 + $0x14] sm:$0xf]
        %v676 = vld [vmem:[#allocation13 + $0x18] sm:$0xf]
        %v677 = vld [vmem:[#allocation13 + $0x1c] sm:$0xf]
        %v678 = vld [vmem:[%s479] sm:$0xf]
        %v679 = vld [vmem:[%s470] sm:$0xf]
        %v680 = vld [vmem:[%s470 + $0x4] sm:$0xf]
        %v681 = vld [vmem:[%s470 + $0x8] sm:$0xf]
        %v682 = vld [vmem:[%s470 + $0xc] sm:$0xf]
        %v683 = vld [vmem:[%s470 + $0x10] sm:$0xf]
        %v684 = vld [vmem:[%s470 + $0x14] sm:$0xf]
        %v685 = vld [vmem:[%s470 + $0x18] sm:$0xf]
        %v686 = vld [vmem:[%s470 + $0x1c] sm:$0xf]
        %v687 = vmul.bf16 %v670, %v679
        %v688 = vmul.bf16 %v671, %v680
        %v689 = vmul.bf16 %v672, %v681
        %v690 = vmul.bf16 %v673, %v682
        %v691 = vmul.bf16 %v674, %v683
        %v692 = vmul.bf16 %v675, %v684
        %v693 = vmul.bf16 %v676, %v685
        %v694 = vmul.bf16 %v677, %v686
        %v695 = vlaneseq
        %v696 = vshrl.u32 %v695, 7
        %v697 = vsub.s32 0, %v696
        %v698 = vrot.slane %v678, %v697
        %v707 = vunpack.c.l.b16 %v687
        %v708 = vunpack.c.l.b16 %v688
        %v709 = vunpack.c.l.b16 %v689
        %v710 = vunpack.c.l.b16 %v690
        %v711 = vunpack.c.l.b16 %v691
        %v712 = vunpack.c.l.b16 %v692
        %v713 = vunpack.c.l.b16 %v693
        %v714 = vunpack.c.l.b16 %v694
        %v715 = vpack.c.b16 %v708, %v707
        %v716 = vpack.c.b16 %v710, %v709
        %v717 = vpack.c.b16 %v712, %v711
        %v718 = vpack.c.b16 %v714, %v713
        %vm723 = vcmask 523264
        %v725 = vsel %vm723, %v660, 0
        %727 = vmatprep.subr.bf16.mxu0 0
        %728 = vmatpush1.bf16.msra.mxu0 %v715
        %729 = vmatprep.subr.bf16.mxu0 0
        %730 = vmatpush1.bf16.msra.mxu0 %v716
        %731 = vmatprep.subr.bf16.mxu0 0
        %732 = vmatpush1.bf16.msra.mxu0 %v717
        %733 = vmatprep.subr.bf16.mxu0 0
        %734 = vmatpush1.bf16.msra.mxu0 %v718
        %735 = vmatprep.subr.bf16.mxu0 0
        %736 = vmatpush1.bf16.msra.mxu0 0
        %737 = vmatprep.subr.bf16.mxu0 0
        %738 = vmatpush1.bf16.msra.mxu0 0
        %739 = vmatprep.subr.bf16.mxu0 0
        %740 = vmatpush1.bf16.msra.mxu0 0
        %741 = vmatprep.subr.bf16.mxu0 0
        %742 = vmatpush1.bf16.msra.mxu0 0
        %743 = vmatprep.subr.bf16.mxu0 0
        %744 = vmatpush1.bf16.msra.mxu0 0
        %745 = vmatprep.subr.bf16.mxu0 0
        %746 = vmatpush1.bf16.msra.mxu0 0
        %747 = vmatprep.subr.bf16.mxu0 0
        %748 = vmatpush1.bf16.msra.mxu0 0
        %749 = vmatprep.subr.bf16.mxu0 0
        %750 = vmatpush1.bf16.msra.mxu0 0
        %751 = vmatprep.subr.bf16.mxu0 0
        %752 = vmatpush1.bf16.msra.mxu0 0
        %753 = vmatprep.subr.bf16.mxu0 0
        %754 = vmatpush1.bf16.msra.mxu0 0
        %755 = vmatprep.subr.bf16.mxu0 0
        %756 = vmatpush1.bf16.msra.mxu0 0
        %757 = vmatprep.subr.bf16.mxu0 0
        %758 = vmatpush1.bf16.msra.mxu0 0
        %759 = vmatprep.mubr.bf16.mxu0 0
        %760 = vmatmul.mubr.bf16.gmra.mrb[0].mxu0 %v725
        %v761 = vpop.f32.mrb[0].mxu0
        %v762 = vadd.f32 %v698, %v761
        %v763 = vpop.f32.mrb[0].mxu0
        %v764 = vpop.f32.mrb[0].mxu0
        %v765 = vpop.f32.mrb[0].mxu0
        %766 = vdwg.mxu0
        %s767 = scalar_lea.vmem %s470, 32 [#allocation14]
        %v768 = vld [vmem:[%s767] sm:$0xf]
        %v769 = vld [vmem:[%s767 + $0x4] sm:$0xf]
        %v770 = vld [vmem:[%s767 + $0x8] sm:$0xf]
        %v771 = vld [vmem:[%s767 + $0xc] sm:$0xf]
        %v772 = vld [vmem:[%s767 + $0x10] sm:$0xf]
        %v773 = vld [vmem:[%s767 + $0x14] sm:$0xf]
        %v774 = vld [vmem:[%s767 + $0x18] sm:$0xf]
        %v775 = vld [vmem:[%s767 + $0x1c] sm:$0xf]
        %v776 = vmul.bf16 %v670, %v768
        %v777 = vmul.bf16 %v671, %v769
        %v778 = vmul.bf16 %v672, %v770
        %v779 = vmul.bf16 %v673, %v771
        %v780 = vmul.bf16 %v674, %v772
        %v781 = vmul.bf16 %v675, %v773
        %v782 = vmul.bf16 %v676, %v774
        %v783 = vmul.bf16 %v677, %v775
        %v784 = vlaneseq
        %v785 = vshrl.u32 %v784, 7
        %v786 = vsub.s32 1, %v785
        %v787 = vrot.slane %v678, %v786
        %v789 = vrot.slane %v660, 4
        %v798 = vunpack.c.l.b16 %v776
        %v799 = vunpack.c.l.b16 %v777
        %v800 = vunpack.c.l.b16 %v778
        %v801 = vunpack.c.l.b16 %v779
        %v802 = vunpack.c.l.b16 %v780
        %v803 = vunpack.c.l.b16 %v781
        %v804 = vunpack.c.l.b16 %v782
        %v805 = vunpack.c.l.b16 %v783
        %v806 = vpack.c.b16 %v799, %v798
        %v807 = vpack.c.b16 %v801, %v800
        %v808 = vpack.c.b16 %v803, %v802
        %v809 = vpack.c.b16 %v805, %v804
        %v815 = vsel %vm723, %v789, 0
        %817 = vmatprep.subr.bf16.mxu0 0
        %818 = vmatpush1.bf16.msra.mxu0 %v806
        %819 = vmatprep.subr.bf16.mxu0 0
        %820 = vmatpush1.bf16.msra.mxu0 %v807
        %821 = vmatprep.subr.bf16.mxu0 0
        %822 = vmatpush1.bf16.msra.mxu0 %v808
        %823 = vmatprep.subr.bf16.mxu0 0
        %824 = vmatpush1.bf16.msra.mxu0 %v809
        %825 = vmatprep.subr.bf16.mxu0 0
        %826 = vmatpush1.bf16.msra.mxu0 0
        %827 = vmatprep.subr.bf16.mxu0 0
        %828 = vmatpush1.bf16.msra.mxu0 0
        %829 = vmatprep.subr.bf16.mxu0 0
        %830 = vmatpush1.bf16.msra.mxu0 0
        %831 = vmatprep.subr.bf16.mxu0 0
        %832 = vmatpush1.bf16.msra.mxu0 0
        %833 = vmatprep.subr.bf16.mxu0 0
        %834 = vmatpush1.bf16.msra.mxu0 0
        %835 = vmatprep.subr.bf16.mxu0 0
        %836 = vmatpush1.bf16.msra.mxu0 0
        %837 = vmatprep.subr.bf16.mxu0 0
        %838 = vmatpush1.bf16.msra.mxu0 0
        %839 = vmatprep.subr.bf16.mxu0 0
        %840 = vmatpush1.bf16.msra.mxu0 0
        %841 = vmatprep.subr.bf16.mxu0 0
        %842 = vmatpush1.bf16.msra.mxu0 0
        %843 = vmatprep.subr.bf16.mxu0 0
        %844 = vmatpush1.bf16.msra.mxu0 0
        %845 = vmatprep.subr.bf16.mxu0 0
        %846 = vmatpush1.bf16.msra.mxu0 0
        %847 = vmatprep.subr.bf16.mxu0 0
        %848 = vmatpush1.bf16.msra.mxu0 0
        %849 = vmatprep.mubr.bf16.mxu0 0
        %850 = vmatmul.mubr.bf16.gmra.mrb[0].mxu0 %v815
        %v851 = vpop.f32.mrb[0].mxu0
        %v852 = vadd.f32 %v787, %v851
        %v853 = vpop.f32.mrb[0].mxu0
        %v854 = vpop.f32.mrb[0].mxu0
        %v855 = vpop.f32.mrb[0].mxu0
        %856 = vdwg.mxu0
        %s857 = scalar_lea.vmem %s470, 64 [#allocation14]
        %v858 = vld [vmem:[%s857] sm:$0xf]
        %v859 = vld [vmem:[%s857 + $0x4] sm:$0xf]
        %v860 = vld [vmem:[%s857 + $0x8] sm:$0xf]
        %v861 = vld [vmem:[%s857 + $0xc] sm:$0xf]
        %v862 = vld [vmem:[%s857 + $0x10] sm:$0xf]
        %v863 = vld [vmem:[%s857 + $0x14] sm:$0xf]
        %v864 = vld [vmem:[%s857 + $0x18] sm:$0xf]
        %v865 = vld [vmem:[%s857 + $0x1c] sm:$0xf]
        %v866 = vmul.bf16 %v670, %v858
        %v867 = vmul.bf16 %v671, %v859
        %v868 = vmul.bf16 %v672, %v860
        %v869 = vmul.bf16 %v673, %v861
        %v870 = vmul.bf16 %v674, %v862
        %v871 = vmul.bf16 %v675, %v863
        %v872 = vmul.bf16 %v676, %v864
        %v873 = vmul.bf16 %v677, %v865
        %v874 = vlaneseq
        %v875 = vshrl.u32 %v874, 7
        %v876 = vsub.s32 2, %v875
        %v877 = vrot.slane %v678, %v876
        %v886 = vunpack.c.l.b16 %v866
        %v887 = vunpack.c.l.b16 %v867
        %v888 = vunpack.c.l.b16 %v868
        %v889 = vunpack.c.l.b16 %v869
        %v890 = vunpack.c.l.b16 %v870
        %v891 = vunpack.c.l.b16 %v871
        %v892 = vunpack.c.l.b16 %v872
        %v893 = vunpack.c.l.b16 %v873
        %v894 = vpack.c.b16 %v887, %v886
        %v895 = vpack.c.b16 %v889, %v888
        %v896 = vpack.c.b16 %v891, %v890
        %v897 = vpack.c.b16 %v893, %v892
        %v903 = vsel %vm723, %v661, 0
        %905 = vmatprep.subr.bf16.mxu0 0
        %906 = vmatpush1.bf16.msra.mxu0 %v894
        %907 = vmatprep.subr.bf16.mxu0 0
        %908 = vmatpush1.bf16.msra.mxu0 %v895
        %909 = vmatprep.subr.bf16.mxu0 0
        %910 = vmatpush1.bf16.msra.mxu0 %v896
        %911 = vmatprep.subr.bf16.mxu0 0
        %912 = vmatpush1.bf16.msra.mxu0 %v897
        %913 = vmatprep.subr.bf16.mxu0 0
        %914 = vmatpush1.bf16.msra.mxu0 0
        %915 = vmatprep.subr.bf16.mxu0 0
        %916 = vmatpush1.bf16.msra.mxu0 0
        %917 = vmatprep.subr.bf16.mxu0 0
        %918 = vmatpush1.bf16.msra.mxu0 0
        %919 = vmatprep.subr.bf16.mxu0 0
        %920 = vmatpush1.bf16.msra.mxu0 0
        %921 = vmatprep.subr.bf16.mxu0 0
        %922 = vmatpush1.bf16.msra.mxu0 0
        %923 = vmatprep.subr.bf16.mxu0 0
        %924 = vmatpush1.bf16.msra.mxu0 0
        %925 = vmatprep.subr.bf16.mxu0 0
        %926 = vmatpush1.bf16.msra.mxu0 0
        %927 = vmatprep.subr.bf16.mxu0 0
        %928 = vmatpush1.bf16.msra.mxu0 0
        %929 = vmatprep.subr.bf16.mxu0 0
        %930 = vmatpush1.bf16.msra.mxu0 0
        %931 = vmatprep.subr.bf16.mxu0 0
        %932 = vmatpush1.bf16.msra.mxu0 0
        %933 = vmatprep.subr.bf16.mxu0 0
        %934 = vmatpush1.bf16.msra.mxu0 0
        %935 = vmatprep.subr.bf16.mxu0 0
        %936 = vmatpush1.bf16.msra.mxu0 0
        %937 = vmatprep.mubr.bf16.mxu0 0
        %938 = vmatmul.mubr.bf16.gmra.mrb[0].mxu0 %v903
        %v939 = vpop.f32.mrb[0].mxu0
        %v940 = vadd.f32 %v877, %v939
        %v941 = vpop.f32.mrb[0].mxu0
        %v942 = vpop.f32.mrb[0].mxu0
        %v943 = vpop.f32.mrb[0].mxu0
        %944 = vdwg.mxu0
        %s945 = scalar_lea.vmem %s470, 96 [#allocation14]
        %v946 = vld [vmem:[%s945] sm:$0xf]
        %v947 = vld [vmem:[%s945 + $0x4] sm:$0xf]
        %v948 = vld [vmem:[%s945 + $0x8] sm:$0xf]
        %v949 = vld [vmem:[%s945 + $0xc] sm:$0xf]
        %v950 = vld [vmem:[%s945 + $0x10] sm:$0xf]
        %v951 = vld [vmem:[%s945 + $0x14] sm:$0xf]
        %v952 = vld [vmem:[%s945 + $0x18] sm:$0xf]
        %v953 = vld [vmem:[%s945 + $0x1c] sm:$0xf]
        %v954 = vmul.bf16 %v670, %v946
        %v955 = vmul.bf16 %v671, %v947
        %v956 = vmul.bf16 %v672, %v948
        %v957 = vmul.bf16 %v673, %v949
        %v958 = vmul.bf16 %v674, %v950
        %v959 = vmul.bf16 %v675, %v951
        %v960 = vmul.bf16 %v676, %v952
        %v961 = vmul.bf16 %v677, %v953
        %v962 = vlaneseq
        %v963 = vshrl.u32 %v962, 7
        %v964 = vsub.s32 3, %v963
        %v965 = vrot.slane %v678, %v964
        %v967 = vrot.slane %v661, 4
        %v976 = vunpack.c.l.b16 %v954
        %v977 = vunpack.c.l.b16 %v955
        %v978 = vunpack.c.l.b16 %v956
        %v979 = vunpack.c.l.b16 %v957
        %v980 = vunpack.c.l.b16 %v958
        %v981 = vunpack.c.l.b16 %v959
        %v982 = vunpack.c.l.b16 %v960
        %v983 = vunpack.c.l.b16 %v961
        %v984 = vpack.c.b16 %v977, %v976
        %v985 = vpack.c.b16 %v979, %v978
        %v986 = vpack.c.b16 %v981, %v980
        %v987 = vpack.c.b16 %v983, %v982
        %v993 = vsel %vm723, %v967, 0
        %995 = vmatprep.subr.bf16.mxu0 0
        %996 = vmatpush1.bf16.msra.mxu0 %v984
        %997 = vmatprep.subr.bf16.mxu0 0
        %998 = vmatpush1.bf16.msra.mxu0 %v985
        %999 = vmatprep.subr.bf16.mxu0 0
        %1000 = vmatpush1.bf16.msra.mxu0 %v986
        %1001 = vmatprep.subr.bf16.mxu0 0
        %1002 = vmatpush1.bf16.msra.mxu0 %v987
        %1003 = vmatprep.subr.bf16.mxu0 0
        %1004 = vmatpush1.bf16.msra.mxu0 0
        %1005 = vmatprep.subr.bf16.mxu0 0
        %1006 = vmatpush1.bf16.msra.mxu0 0
        %1007 = vmatprep.subr.bf16.mxu0 0
        %1008 = vmatpush1.bf16.msra.mxu0 0
        %1009 = vmatprep.subr.bf16.mxu0 0
        %1010 = vmatpush1.bf16.msra.mxu0 0
        %1011 = vmatprep.subr.bf16.mxu0 0
        %1012 = vmatpush1.bf16.msra.mxu0 0
        %1013 = vmatprep.subr.bf16.mxu0 0
        %1014 = vmatpush1.bf16.msra.mxu0 0
        %1015 = vmatprep.subr.bf16.mxu0 0
        %1016 = vmatpush1.bf16.msra.mxu0 0
        %1017 = vmatprep.subr.bf16.mxu0 0
        %1018 = vmatpush1.bf16.msra.mxu0 0
        %1019 = vmatprep.subr.bf16.mxu0 0
        %1020 = vmatpush1.bf16.msra.mxu0 0
        %1021 = vmatprep.subr.bf16.mxu0 0
        %1022 = vmatpush1.bf16.msra.mxu0 0
        %1023 = vmatprep.subr.bf16.mxu0 0
        %1024 = vmatpush1.bf16.msra.mxu0 0
        %1025 = vmatprep.subr.bf16.mxu0 0
        %1026 = vmatpush1.bf16.msra.mxu0 0
        %1027 = vmatprep.mubr.bf16.mxu0 0
        %1028 = vmatmul.mubr.bf16.gmra.mrb[0].mxu0 %v993
        %v1029 = vpop.f32.mrb[0].mxu0
        %v1030 = vadd.f32 %v965, %v1029
        %v1031 = vpop.f32.mrb[0].mxu0
        %v1032 = vpop.f32.mrb[0].mxu0
        %v1033 = vpop.f32.mrb[0].mxu0
        %1034 = vdwg.mxu0
        %v1043 = vunpack.c.l.b16 %v662
        %v1044 = vunpack.c.l.b16 %v663
        %v1045 = vunpack.c.l.b16 %v664
        %v1046 = vunpack.c.l.b16 %v665
        %v1047 = vunpack.c.l.b16 %v666
        %v1048 = vunpack.c.l.b16 %v667
        %v1049 = vunpack.c.l.b16 %v668
        %v1050 = vunpack.c.l.b16 %v669
        %v1051 = vpack.c.b16 %v1044, %v1043
        %v1052 = vpack.c.b16 %v1046, %v1045
        %v1053 = vpack.c.b16 %v1048, %v1047
        %v1054 = vpack.c.b16 %v1050, %v1049
        %1059 = vmatprep.subr.bf16.mxu0 0
        %1060 = vmatpush1.bf16.msra.mxu0 %v1051
        %1061 = vmatprep.subr.bf16.mxu0 0
        %1062 = vmatpush1.bf16.msra.mxu0 %v1052
        %1063 = vmatprep.subr.bf16.mxu0 0
        %1064 = vmatpush1.bf16.msra.mxu0 %v1053
        %1065 = vmatprep.subr.bf16.mxu0 0
        %1066 = vmatpush1.bf16.msra.mxu0 %v1054
        %1067 = vmatprep.subr.bf16.mxu0 0
        %1068 = vmatpush1.bf16.msra.mxu0 0
        %1069 = vmatprep.subr.bf16.mxu0 0
        %1070 = vmatpush1.bf16.msra.mxu0 0
        %1071 = vmatprep.subr.bf16.mxu0 0
        %1072 = vmatpush1.bf16.msra.mxu0 0
        %1073 = vmatprep.subr.bf16.mxu0 0
        %1074 = vmatpush1.bf16.msra.mxu0 0
        %1075 = vmatprep.subr.bf16.mxu0 0
        %1076 = vmatpush1.bf16.msra.mxu0 0
        %1077 = vmatprep.subr.bf16.mxu0 0
        %1078 = vmatpush1.bf16.msra.mxu0 0
        %1079 = vmatprep.subr.bf16.mxu0 0
        %1080 = vmatpush1.bf16.msra.mxu0 0
        %1081 = vmatprep.subr.bf16.mxu0 0
        %1082 = vmatpush1.bf16.msra.mxu0 0
        %1083 = vmatprep.subr.bf16.mxu0 0
        %1084 = vmatpush1.bf16.msra.mxu0 0
        %1085 = vmatprep.subr.bf16.mxu0 0
        %1086 = vmatpush1.bf16.msra.mxu0 0
        %1087 = vmatprep.subr.bf16.mxu0 0
        %1088 = vmatpush1.bf16.msra.mxu0 0
        %1089 = vmatprep.subr.bf16.mxu0 0
        %1090 = vmatpush1.bf16.msra.mxu0 0
        %1091 = vmatprep.mubr.bf16.mxu0 0
        %1092 = vmatmul.mubr.bf16.gmra.mrb[0].mxu0 %v725
        %v1093 = vpop.f32.mrb[0].mxu0
        %v1094 = vadd.f32 %v762, %v1093
        %v1095 = vpop.f32.mrb[0].mxu0
        %v1096 = vpop.f32.mrb[0].mxu0
        %v1097 = vadd.f32 %v852, %v1096
        %v1098 = vpop.f32.mrb[0].mxu0
        %1099 = vmatprep.mubr.bf16.mxu0 0
        %1100 = vmatmul.mubr.bf16.gmra.mrb[0].mxu0 %v903
        %v1101 = vpop.f32.mrb[0].mxu0
        %v1102 = vadd.f32 %v940, %v1101
        %v1103 = vpop.f32.mrb[0].mxu0
        %v1104 = vpop.f32.mrb[0].mxu0
        %v1105 = vadd.f32 %v1030, %v1104
        %v1106 = vpop.f32.mrb[0].mxu0
        %1107 = vdwg.mxu0
        %vm1108 = vcmask 80896
        %v1109 = vsel %vm1108, %v1094, -inf
        %1110 = vmax.xlane.f32.xlu0 %v1109
        %v1111 = vpop.xlane.xlu0 %1110
        %v1112 = vsel %vm1108, %v1097, -inf
        %1113 = vmax.xlane.f32.xlu0 %v1112
        %v1114 = vpop.xlane.xlu0 %1113
        %v1115 = vsel %vm1108, %v1102, -inf
        %1116 = vmax.xlane.f32.xlu0 %v1115
        %v1117 = vpop.xlane.xlu0 %1116
        %v1118 = vsel %vm1108, %v1105, -inf
        %1119 = vmax.xlane.f32.xlu0 %v1118
        %v1120 = vpop.xlane.xlu0 %1119
        %v1121 = vsub.f32 %v1094, %v1111
        %v1122 = vsub.f32 %v1097, %v1114
        %v1123 = vsub.f32 %v1102, %v1117
        %v1124 = vsub.f32 %v1105, %v1120
        %v1125 = vmul.f32 %v1121, 1.442695
        %v1126 = vpow.pop %v1125
        %v1127 = vmul.f32 %v1122, 1.442695
        %v1128 = vpow.pop %v1127
        %v1129 = vmul.f32 %v1123, 1.442695
        %v1130 = vpow.pop %v1129
        %v1131 = vmul.f32 %v1124, 1.442695
        %v1132 = vpow.pop %v1131
        %v1133 = vsel %vm1108, %v1126, 0.0
        %1134 = vadd.xlane.f32.xlu0 %v1133
        %v1135 = vpop.xlane.xlu0 %1134
        %v1136 = vsel %vm1108, %v1128, 0.0
        %1137 = vadd.xlane.f32.xlu0 %v1136
        %v1138 = vpop.xlane.xlu0 %1137
        %v1139 = vsel %vm1108, %v1130, 0.0
        %1140 = vadd.xlane.f32.xlu0 %v1139
        %v1141 = vpop.xlane.xlu0 %1140
        %v1142 = vsel %vm1108, %v1132, 0.0
        %1143 = vadd.xlane.f32.xlu0 %v1142
        %v1144 = vpop.xlane.xlu0 %1143
        %v1145 = vlog2.pop %v1135
        %v1146 = vmul.f32 %v1145, 0.6931472
        %v1147 = vlog2.pop %v1138
        %v1148 = vmul.f32 %v1147, 0.6931472
        %v1149 = vlog2.pop %v1141
        %v1150 = vmul.f32 %v1149, 0.6931472
        %v1151 = vlog2.pop %v1144
        %v1152 = vmul.f32 %v1151, 0.6931472
        %v1153 = vsub.f32 %v1121, %v1146
        %v1154 = vsub.f32 %v1122, %v1148
        %v1155 = vsub.f32 %v1123, %v1150
        %v1156 = vsub.f32 %v1124, %v1152
        %1157 = vst.msk [vmem:[%s528] sm:$0xff] %vm1108, %v1153
        %1158 = vst.msk [vmem:[%s528 + $0x8] sm:$0xff] %vm1108, %v1154
        %1159 = vst.msk [vmem:[%s528 + $0x10] sm:$0xff] %vm1108, %v1155
        %1160 = vst.msk [vmem:[%s528 + $0x18] sm:$0xff] %vm1108, %v1156
        %s1161 = sand.u32 %s249, 1
        %s1162 = scalar_lea.sflag [#allocation4], %s1161
        %s1163 = sand.u32 %s249, 1
        %s1164 = smul.addr %s1163, 32
        %s1165 = scalar_lea.vmem [#allocation17], %s1164
        // Predicated region
        $region93: #{_lambda_.1} parent=55 // pred_check
          %p1166 = pneg %p259
        $region94: #{_lambda_.1} parent=55 // pred_check_branch
          %1168 = sbr.rel (%p1166) target = $region96
        $region95: #{_lambda_.1} parent=55 // pred_region
          %s1169 = smul.u32 4, %s32
          %s1171 = ssub.s32 512, 512
          %1172 = vsyncadd %s1162, %s1171
          %s1173 = smul.addr %s1169, 128
          %s1174 = scalar_lea.hbm %s9, %s1173
          %s1175 = sshll.u32 %s1165, 4
          %s1176 = int_to_ptr.vmem [resolvable:$true] %s1175
          %1181 = dma.vmem_to_hbm [thread:$0]  %s1176, 512, %s1174, %s1162, 128, 128, 8
        $region96: #{_lambda_.1} parent=55 // pred_fallthru
          _
      $region56: #{_lambda_.1} parent=5 // pred_fallthru
        _
      %p1182 = scmp.le.s32.totalorder 2, %s27
      // Predicated region
      $region97: #{_lambda_.1} parent=5 // pred_check
        %p1183 = pneg %p1182
      $region98: #{_lambda_.1} parent=5 // pred_check_branch
        %1185 = sbr.rel (%p1183) target = $region100
      $region99: #{_lambda_.1} parent=5 // pred_region
        %s1186 = ssub.s32 %s27, 2
        // Predicated region
        $region101: #{_lambda_.1} parent=99 // pred_check
          %p1187 = pneg %p265
        $region102: #{_lambda_.1} parent=99 // pred_check_branch
          %1189 = sbr.rel (%p1187) target = $region104
        $region103: #{_lambda_.1} parent=99 // pred_region
          %s1190 = sand.u32 %s250, 1
          %s1191 = scalar_lea.sflag [#allocation4], %s1190
          %s1192 = sand.u32 %s250, 1
          %s1193 = smul.addr %s1192, 32
          %s1194 = scalar_lea.vmem [#allocation17], %s1193
          %1195 = dma.done %s1191, 512
        $region104: #{_lambda_.1} parent=99 // pred_fallthru
          _
      $region100: #{_lambda_.1} parent=5 // pred_fallthru
        _
    $region6: #{_lambda_.1} parent=1 // loop_footer
      %s31 = sadd.s32 1, %s27
    $region7: #{_lambda_.1} parent=1 // loop_footer_branch
      %26 = sbr.rel target = $region3
    $region8: #{_lambda_.1} parent=1 // loop_exit
      _
    %1196 = vsyncpa [#allocation3], 1
    %s1197 = scalar_lea.sflag [#allocation3], 1
    %1198 = vsyncpa %s1197, 1
    %1199 = vsyncpa [#allocation6], 1
    %1200 = vsyncpa [#allocation9], 1
    %s1201 = scalar_lea.sflag [#allocation9], 1
    %1202 = vsyncpa %s1201, 1
    %1203 = vsyncpa [#allocation12], 1
    %1204 = vsyncpa [#allocation15], 1
    %s1205 = scalar_lea.sflag [#allocation15], 1
    %1206 = vsyncpa %s1205, 1
    %1207 = vsyncpa [#allocation4], 1
    %s1208 = scalar_lea.sflag [#allocation4], 1
    %1209 = vsyncpa %s1208, 1

</llo_original>
